<compile_context>
chip_gen: v7x
topology: tpu7x:2x2x1
jax: 0.10.0
libtpu: 0.0.40
codegen_flags: <defaults>
</compile_context>

<pallas_src>
import functools
import math

import jax
import jax.numpy as jnp
from jax.experimental import pallas as pl
from jax.experimental.pallas import tpu as pltpu

LANE = 128


def _round_up(n, m):
    return ((n + m - 1) // m) * m


def _pad2(a, rows, cols):
    return jnp.pad(a, ((0, rows - a.shape[0]), (0, cols - a.shape[1])))


# ---------------------------------------------------------------------------
# Kernel
# ---------------------------------------------------------------------------
def _fls_attention_kernel(
    x_ref,       # (bblk*T, F)        bf16  -- bblk samples, time-major
    w1_ref,      # (F, Hp)            bf16  (bn0 + bn1 folded in)
    wbig_ref,    # (Hp, 4*Hp + Cp)    bf16  [w2 | w3 | wa | wc | wfc], BN folded
    bias_ref,    # (1, 2*Hp + Cp)     f32   [ba | bc | bfc]
    o_ref,       # (bblk, Cp)         f32
    *, bblk, t, hp, cp,
):
    f32 = jnp.float32
    bf16 = jnp.bfloat16

    x = x_ref[...]                                                    # bf16

    # 128-aligned lane slices of the consolidated weight / bias slabs (free).
    w2 = wbig_ref[:, 0:hp]
    w3 = wbig_ref[:, hp:2 * hp]
    wac = wbig_ref[:, 2 * hp:4 * hp]          # fused [wa | wc]
    wfc = wbig_ref[:, 4 * hp:4 * hp + cp]
    ba_bc = bias_ref[:, 0:2 * hp]             # fused [ba | bc]
    bfc = bias_ref[:, 2 * hp:2 * hp + cp]

    # EmbeddingLayers (eval mode: BN folded into weights, dropout identity).
    a1 = jnp.maximum(
        jnp.dot(x, w1_ref[...], preferred_element_type=f32), 0.0)
    a2 = jnp.maximum(
        jnp.dot(a1.astype(bf16), w2, preferred_element_type=f32), 0.0)
    emb = jnp.maximum(
        jnp.dot(a2.astype(bf16), w3, preferred_element_type=f32), 0.0)
    emb_bf = emb.astype(bf16)

    # Attention + classification heads in one fused matmul.
    ac = jnp.dot(emb_bf, wac, preferred_element_type=f32) + ba_bc     # (M, 2*Hp)
    att = jax.nn.sigmoid(ac[:, :hp])
    cla = ac[:, hp:]

    eps = 1e-7
    att = jnp.clip(att, eps, 1.0 - eps)

    # Pooling over time.  (t, hp) minor dims stay tile-aligned for t % 8 == 0.
    att = att.reshape(bblk, t, hp)
    cla = cla.reshape(bblk, t, hp)
    att_sum = jnp.sum(att, axis=1)                                    # (bblk, Hp)
    num = jnp.sum(att * cla, axis=1)                                  # (bblk, Hp)
    b2 = num * pl.reciprocal(att_sum, approx=True)                    # pooled feature

    # bn_attention folded into wfc (scale > 0 so ReLU commutes); then fc+sigmoid.
    b2 = jnp.maximum(b2, 0.0)
    out = jax.nn.sigmoid(
        jnp.dot(b2.astype(bf16), wfc, preferred_element_type=f32) + bfc)
    o_ref[...] = out.astype(o_ref.dtype)


# ---------------------------------------------------------------------------
# Host-side, one-time preparation: fold BN, pad lane dims to 128, consolidate
# weight/bias slabs, cast MXU operands to bf16.
# ---------------------------------------------------------------------------
def prepare_params(p):
    F, H = p["w1"].shape
    C = p["wfc"].shape[1]
    Hp, Cp = _round_up(H, LANE), _round_up(C, LANE)

    # Fold eval-mode BatchNorm scales into the weights (all scales > 0).
    w1 = (p["s0"][:, None] * p["w1"]) * p["s1"][None, :]
    w2 = p["w2"] * p["s2"][None, :]
    w3 = p["w3"] * p["s3"][None, :]
    wfc = p["sbn"][:, None] * p["wfc"]

    w1p = _pad2(w1, F, Hp).astype(jnp.bfloat16)          # F NOT padded
    wbig = jnp.concatenate(
        [_pad2(w2, Hp, Hp), _pad2(w3, Hp, Hp),
         _pad2(p["wa"], Hp, Hp), _pad2(p["wc"], Hp, Hp),
         _pad2(wfc, Hp, Cp)], axis=1).astype(jnp.bfloat16)
    bias = jnp.concatenate(
        [_pad2(p["ba"], 1, Hp), _pad2(p["bc"], 1, Hp),
         _pad2(p["bfc"], 1, Cp)], axis=1).astype(jnp.float32)
    return dict(w1=w1p, wbig=wbig, bias=bias)


def _choose_bblk(B, T, F, Hp, Cp, vmem_budget_bytes):
    """Largest divisor of B whose per-step working set fits the VMEM budget."""
    def step_bytes(bb):
        M = bb * T
        return (2 * M * F * 2          # double-buffered bf16 x slab
                + 3 * M * Hp * 4       # a1 / a2 / emb (f32)
                + M * 2 * Hp * 4       # fused att|cla (f32)
                + 4 * M * Hp * 2       # bf16 casts of intermediates
                + 2 * bb * Cp * 4)     # double-buffered f32 output

    cands = [d for d in range(1, B + 1)
             if B % d == 0 and (d == B or (d % 8 == 0 and (d * T) % 16 == 0))]
    cands.sort(reverse=True)
    for d in cands:
        if step_bytes(d) <= vmem_budget_bytes:
            return d
    return cands[-1]


# ---------------------------------------------------------------------------
# Forward pass
# ---------------------------------------------------------------------------
def _fls_forward(x, w1p, wbig, bias, *, bblk=None,
                 vmem_limit_bytes=48 * 1024 * 1024):
    B, T, F = x.shape
    Hp = w1p.shape[1]
    Cp = wbig.shape[1] - 4 * Hp

    xp = x.astype(jnp.bfloat16).reshape(B * T, F)        # no F padding

    if bblk is None:
        bblk = _choose_bblk(B, T, F, Hp, Cp,
                            vmem_budget_bytes=int(0.6 * vmem_limit_bytes))
    assert B % bblk == 0, "batch must be divisible by the batch block"
    nblk = B // bblk
    M = bblk * T
    if nblk > 1:
        assert bblk % 8 == 0 and M % 16 == 0, "sublane alignment of per-step blocks"

    grid_spec = pltpu.PrefetchScalarGridSpec(
        num_scalar_prefetch=0,
        grid=(nblk,),
        in_specs=[
            pl.BlockSpec((M, F), lambda b: (b, 0)),               # x slab
            pl.BlockSpec((F, Hp), lambda b: (0, 0)),              # w1
            pl.BlockSpec((Hp, 4 * Hp + Cp), lambda b: (0, 0)),    # weight slab
            pl.BlockSpec((1, 2 * Hp + Cp), lambda b: (0, 0)),     # bias slab
        ],
        out_specs=pl.BlockSpec((bblk, Cp), lambda b: (b, 0)),
    )

    # Advisory cost hint for XLA scheduling.
    flops = (2 * B * T * F * Hp            # x @ w1
             + 2 * 2 * B * T * Hp * Hp     # w2, w3
             + 2 * B * T * Hp * 2 * Hp     # fused wa|wc
             + 2 * B * Hp * Cp             # fc
             + 8 * B * T * Hp)             # pooling / elementwise
    transcendentals = B * T * Hp + B * Cp + B * Hp
    bytes_accessed = int(xp.size * 2 + w1p.size * 2 + wbig.size * 2
                         + bias.size * 4 + B * Cp * 4)
    cost = pl.CostEstimate(flops=flops, transcendentals=transcendentals,
                           bytes_accessed=bytes_accessed)

    kernel = functools.partial(_fls_attention_kernel,
                               bblk=bblk, t=T, hp=Hp, cp=Cp)

    out = pl.pallas_call(
        kernel,
        out_shape=jax.ShapeDtypeStruct((B, Cp), jnp.float32),
        grid_spec=grid_spec,
        compiler_params=pltpu.CompilerParams(
            dimension_semantics=("parallel",),
            vmem_limit_bytes=vmem_limit_bytes),
        cost_estimate=cost,
    )(xp, w1p, wbig, bias)
    return out


def make_forward(params, *, bblk=None, vmem_limit_bytes=48 * 1024 * 1024):
    """Fold/pad the weights once and return a jitted forward(x) -> (B, classes)."""
    prep = prepare_params(params)
    classes = params["wfc"].shape[1]

    @jax.jit
    def forward(x):
        out = _fls_forward(x, prep["w1"], prep["wbig"], prep["bias"],
                           bblk=bblk, vmem_limit_bytes=vmem_limit_bytes)
        return out[:, :classes]

    return forward


# ---------------------------------------------------------------------------
# Parameter construction (matches PyTorch init_layer / init_bn, eval mode)
# ---------------------------------------------------------------------------
def _init_linear_like(key, n_in, n_out):
    """PyTorch init_layer: uniform(-scale, scale), scale = sqrt(2/n_in)*sqrt(3).
    Returned as (n_in, n_out) for right-multiplication (== PyTorch weight.T)."""
    scale = math.sqrt(2.0 / n_in) * math.sqrt(3.0)
    return jax.random.uniform(key, (n_in, n_out), jnp.float32, -scale, scale)


def make_params(key, freq_bins, classes_num, hidden_units):
    keys = jax.random.split(key, 6)
    bn_eps = 1e-5
    bn_scale = 1.0 / math.sqrt(1.0 + bn_eps)  # gamma=1, beta=0, mean=0, var=1

    return {
        # EmbeddingLayers: 1x1 convs, no bias.
        "w1": _init_linear_like(keys[0], freq_bins, hidden_units),
        "w2": _init_linear_like(keys[1], hidden_units, hidden_units),
        "w3": _init_linear_like(keys[2], hidden_units, hidden_units),
        # Attention: 1x1 convs with bias (bias inited to 0).
        "wa": _init_linear_like(keys[3], hidden_units, hidden_units),
        "ba": jnp.zeros((1, hidden_units), jnp.float32),
        "wc": _init_linear_like(keys[4], hidden_units, hidden_units),
        "bc": jnp.zeros((1, hidden_units), jnp.float32),
        # Final fc.
        "wfc": _init_linear_like(keys[5], hidden_units, classes_num),
        "bfc": jnp.zeros((1, classes_num), jnp.float32),
        # Eval-mode BatchNorm scales (beta/mean = 0, so scale only).
        "s0": jnp.full((freq_bins,), bn_scale, jnp.float32),
        "s1": jnp.full((hidden_units,), bn_scale, jnp.float32),
        "s2": jnp.full((hidden_units,), bn_scale, jnp.float32),
        "s3": jnp.full((hidden_units,), bn_scale, jnp.float32),
        "sbn": jnp.full((hidden_units,), bn_scale, jnp.float32),
    }


# ---------------------------------------------------------------------------
# References for correctness checking
# ---------------------------------------------------------------------------
def reference_module_f32(x, p):
    """Pure-JAX f32 replica of the PyTorch module (eval mode)."""
    a0 = x * p["s0"]
    a1 = jnp.maximum(a0 @ p["w1"] * p["s1"], 0.0)
    a2 = jnp.maximum(a1 @ p["w2"] * p["s2"], 0.0)
    emb = jnp.maximum(a2 @ p["w3"] * p["s3"], 0.0)
    att = jax.nn.sigmoid(emb @ p["wa"] + p["ba"])
    cla = emb @ p["wc"] + p["bc"]
    eps = 1e-7
    att = jnp.clip(att, eps, 1.0 - eps)
    norm_att = att / jnp.sum(att, axis=1, keepdims=True)
    b2 = jnp.sum(norm_att * cla, axis=1)
    b2 = jnp.maximum(b2 * p["sbn"], 0.0)
    return jax.nn.sigmoid(b2 @ p["wfc"] + p["bfc"])


def reference_mixed(x, prep):
    """Replicates the kernel's folded / padded / bf16 math in plain JAX
    (exact division instead of the approx reciprocal)."""
    f32, bf16 = jnp.float32, jnp.bfloat16
    w1p, wbig, bias = prep["w1"], prep["wbig"], prep["bias"]
    Hp = w1p.shape[1]
    B, T, F = x.shape
    xp = x.astype(bf16).reshape(B * T, F)
    w2, w3 = wbig[:, :Hp], wbig[:, Hp:2 * Hp]
    wac, wfc = wbig[:, 2 * Hp:4 * Hp], wbig[:, 4 * Hp:]
    ba_bc, bfc = bias[:, :2 * Hp], bias[:, 2 * Hp:]

    a1 = jnp.maximum(jnp.dot(xp, w1p, preferred_element_type=f32), 0.0)
    a2 = jnp.maximum(jnp.dot(a1.astype(bf16), w2, preferred_element_type=f32), 0.0)
    emb = jnp.maximum(jnp.dot(a2.astype(bf16), w3, preferred_element_type=f32), 0.0)
    emb_bf = emb.astype(bf16)
    ac = jnp.dot(emb_bf, wac, preferred_element_type=f32) + ba_bc
    att = jax.nn.sigmoid(ac[:, :Hp])
    cla = ac[:, Hp:]
    eps = 1e-7
    att = jnp.clip(att, eps, 1.0 - eps)
    att = att.reshape(B, T, Hp)
    cla = cla.reshape(B, T, Hp)
    b2 = jnp.sum(att * cla, axis=1) / jnp.sum(att, axis=1)
    b2 = jnp.maximum(b2, 0.0)
    return jax.nn.sigmoid(jnp.dot(b2.astype(bf16), wfc,
                                  preferred_element_type=f32) + bfc)


if __name__ == "__main__":
    B, T, FREQ, HIDDEN, CLASSES = 16, 8, 64, 32, 10

    key = jax.random.PRNGKey(0)
    k_x, k_p = jax.random.split(key)
    x = jax.random.normal(k_x, (B, T, FREQ), jnp.float32)
    params = make_params(k_p, FREQ, CLASSES, HIDDEN)

    forward = make_forward(params)                  # weights folded/padded once
    out = jax.block_until_ready(forward(x))
    assert out.shape == (B, CLASSES)

    # Check against a JAX replica of the kernel's mixed-precision math
    # (tolerance covers the approx reciprocal, ~2^-12 relative error).
    prep = prepare_params(params)
    ref_mixed = reference_mixed(x, prep)[:, :CLASSES]
    assert jnp.allclose(out, ref_mixed, rtol=5e-3, atol=5e-3), \
        "mismatch vs mixed-precision reference"

    # Loose check against full-f32 module semantics (bf16 MXU operands only).
    ref_f32 = reference_module_f32(x, params)
    assert float(jnp.max(jnp.abs(out - ref_f32))) < 5e-2, \
        "drifted from f32 module semantics"

    print("KERNEL_OK")
</pallas_src>

<mosaic_0001>
module attributes {stable_mosaic.version = 11 : i64} {
  func.func @_fls_attention_kernel(%arg0: i32, %arg1: memref<128x64xbf16, #tpu.memory_space<vmem>>, %arg2: memref<64x128xbf16, #tpu.memory_space<vmem>>, %arg3: memref<128x640xbf16, #tpu.memory_space<vmem>>, %arg4: memref<1x384xf32, #tpu.memory_space<vmem>>, %arg5: memref<16x128xf32, #tpu.memory_space<vmem>>) attributes {dimension_semantics = [#tpu.dimension_semantics<parallel>], iteration_bounds = array<i64: 1>, scalar_prefetch = 0 : i64, scratch_operands = 0 : i64, tpu.core_type = #tpu.core_type<tc>, window_params = [{transform_indices = @transform_0, window_bounds = array<i64: 128, 64>}, {pipeline_mode = #tpu.pipeline_mode<synchronous>, transform_indices = @transform_1, window_bounds = array<i64: 64, 128>}, {pipeline_mode = #tpu.pipeline_mode<synchronous>, transform_indices = @transform_2, window_bounds = array<i64: 128, 640>}, {pipeline_mode = #tpu.pipeline_mode<synchronous>, transform_indices = @transform_3, window_bounds = array<i64: 1, 384>}, {transform_indices = @transform_4, window_bounds = array<i64: 16, 128>}]} {
    %c0 = arith.constant 0 : index
    %c0_0 = arith.constant 0 : index
    %0 = vector.load %arg1[%c0, %c0_0] : memref<128x64xbf16, #tpu.memory_space<vmem>>, vector<128x64xbf16>
    %c0_1 = arith.constant 0 : index
    %c0_2 = arith.constant 0 : index
    %1 = vector.load %arg3[%c0_1, %c0_2] : memref<128x640xbf16, #tpu.memory_space<vmem>>, vector<128x128xbf16>
    %c0_3 = arith.constant 0 : index
    %c128 = arith.constant 128 : index
    %2 = vector.load %arg3[%c0_3, %c128] : memref<128x640xbf16, #tpu.memory_space<vmem>>, vector<128x128xbf16>
    %c0_4 = arith.constant 0 : index
    %c256 = arith.constant 256 : index
    %3 = vector.load %arg3[%c0_4, %c256] : memref<128x640xbf16, #tpu.memory_space<vmem>>, vector<128x256xbf16>
    %c0_5 = arith.constant 0 : index
    %c512 = arith.constant 512 : index
    %4 = vector.load %arg3[%c0_5, %c512] : memref<128x640xbf16, #tpu.memory_space<vmem>>, vector<128x128xbf16>
    %c0_6 = arith.constant 0 : index
    %c0_7 = arith.constant 0 : index
    %5 = vector.load %arg4[%c0_6, %c0_7] : memref<1x384xf32, #tpu.memory_space<vmem>>, vector<1x256xf32>
    %c0_8 = arith.constant 0 : index
    %c256_9 = arith.constant 256 : index
    %6 = vector.load %arg4[%c0_8, %c256_9] : memref<1x384xf32, #tpu.memory_space<vmem>>, vector<1x128xf32>
    %c0_10 = arith.constant 0 : index
    %c0_11 = arith.constant 0 : index
    %7 = vector.load %arg2[%c0_10, %c0_11] : memref<64x128xbf16, #tpu.memory_space<vmem>>, vector<64x128xbf16>
    %cst = arith.constant dense<0.000000e+00> : vector<128x128xf32>
    %8 = tpu.matmul %0, %7, %cst {dimension_numbers = #tpu.dot_dimension_numbers<[1], [0], [0], [1], [0, 0, 1, 1], [], []>} : vector<128x64xbf16>, vector<64x128xbf16>, vector<128x128xf32> -> vector<128x128xf32>
    %cst_12 = arith.constant 0.000000e+00 : f32
    %9 = vector.broadcast %cst_12 : f32 to vector<128x128xf32>
    %10 = arith.maximumf %8, %9 : vector<128x128xf32>
    %11 = arith.truncf %10 : vector<128x128xf32> to vector<128x128xbf16>
    %cst_13 = arith.constant dense<0.000000e+00> : vector<128x128xf32>
    %12 = tpu.matmul %11, %1, %cst_13 {dimension_numbers = #tpu.dot_dimension_numbers<[1], [0], [0], [1], [0, 0, 1, 1], [], []>} : vector<128x128xbf16>, vector<128x128xbf16>, vector<128x128xf32> -> vector<128x128xf32>
    %cst_14 = arith.constant 0.000000e+00 : f32
    %13 = vector.broadcast %cst_14 : f32 to vector<128x128xf32>
    %14 = arith.maximumf %12, %13 : vector<128x128xf32>
    %15 = arith.truncf %14 : vector<128x128xf32> to vector<128x128xbf16>
    %cst_15 = arith.constant dense<0.000000e+00> : vector<128x128xf32>
    %16 = tpu.matmul %15, %2, %cst_15 {dimension_numbers = #tpu.dot_dimension_numbers<[1], [0], [0], [1], [0, 0, 1, 1], [], []>} : vector<128x128xbf16>, vector<128x128xbf16>, vector<128x128xf32> -> vector<128x128xf32>
    %cst_16 = arith.constant 0.000000e+00 : f32
    %17 = vector.broadcast %cst_16 : f32 to vector<128x128xf32>
    %18 = arith.maximumf %16, %17 : vector<128x128xf32>
    %19 = arith.truncf %18 : vector<128x128xf32> to vector<128x128xbf16>
    %cst_17 = arith.constant dense<0.000000e+00> : vector<128x256xf32>
    %20 = tpu.matmul %19, %3, %cst_17 {dimension_numbers = #tpu.dot_dimension_numbers<[1], [0], [0], [1], [0, 0, 1, 1], [], []>} : vector<128x128xbf16>, vector<128x256xbf16>, vector<128x256xf32> -> vector<128x256xf32>
    %21 = vector.broadcast %5 : vector<1x256xf32> to vector<128x256xf32>
    %22 = arith.addf %20, %21 : vector<128x256xf32>
    %23 = vector.extract_strided_slice %22 {offsets = [0, 0], sizes = [128, 128], strides = [1, 1]} : vector<128x256xf32> to vector<128x128xf32>
    %24 = arith.negf %23 : vector<128x128xf32>
    %25 = math.exp %24 : vector<128x128xf32>
    %cst_18 = arith.constant 1.000000e+00 : f32
    %26 = vector.broadcast %cst_18 : f32 to vector<128x128xf32>
    %27 = arith.addf %26, %25 : vector<128x128xf32>
    %28 = arith.divf %26, %27 : vector<128x128xf32>
    %29 = vector.extract_strided_slice %22 {offsets = [0, 128], sizes = [128, 128], strides = [1, 1]} : vector<128x256xf32> to vector<128x128xf32>
    %cst_19 = arith.constant 1.000000e-07 : f32
    %cst_20 = arith.constant 0.99999988 : f32
    %30 = vector.broadcast %cst_19 : f32 to vector<128x128xf32>
    %31 = arith.maximumf %30, %28 : vector<128x128xf32>
    %32 = vector.broadcast %cst_20 : f32 to vector<128x128xf32>
    %33 = arith.minimumf %32, %31 : vector<128x128xf32>
    %34 = vector.shape_cast %33 : vector<128x128xf32> to vector<16x8x128xf32>
    %35 = vector.shape_cast %29 : vector<128x128xf32> to vector<16x8x128xf32>
    %cst_21 = arith.constant dense<0.000000e+00> : vector<16x128xf32>
    %36 = vector.multi_reduction <add>, %34, %cst_21 [1] : vector<16x8x128xf32> to vector<16x128xf32>
    %37 = arith.mulf %34, %35 : vector<16x8x128xf32>
    %cst_22 = arith.constant dense<0.000000e+00> : vector<16x128xf32>
    %38 = vector.multi_reduction <add>, %37, %cst_22 [1] : vector<16x8x128xf32> to vector<16x128xf32>
    %39 = tpu.reciprocal %36 {approx = true} : vector<16x128xf32> -> vector<16x128xf32>
    %40 = arith.mulf %38, %39 : vector<16x128xf32>
    %cst_23 = arith.constant 0.000000e+00 : f32
    %41 = vector.broadcast %cst_23 : f32 to vector<16x128xf32>
    %42 = arith.maximumf %40, %41 : vector<16x128xf32>
    %43 = arith.truncf %42 : vector<16x128xf32> to vector<16x128xbf16>
    %cst_24 = arith.constant dense<0.000000e+00> : vector<16x128xf32>
    %44 = tpu.matmul %43, %4, %cst_24 {dimension_numbers = #tpu.dot_dimension_numbers<[1], [0], [0], [1], [0, 0, 1, 1], [], []>} : vector<16x128xbf16>, vector<128x128xbf16>, vector<16x128xf32> -> vector<16x128xf32>
    %45 = vector.broadcast %6 : vector<1x128xf32> to vector<16x128xf32>
    %46 = arith.addf %44, %45 : vector<16x128xf32>
    %47 = arith.negf %46 : vector<16x128xf32>
    %48 = math.exp %47 : vector<16x128xf32>
    %cst_25 = arith.constant 1.000000e+00 : f32
    %49 = vector.broadcast %cst_25 : f32 to vector<16x128xf32>
    %50 = arith.addf %49, %48 : vector<16x128xf32>
    %51 = arith.divf %49, %50 : vector<16x128xf32>
    %c0_26 = arith.constant 0 : index
    %c0_27 = arith.constant 0 : index
    %52 = vector.load %arg5[%c0_26, %c0_27] : memref<16x128xf32, #tpu.memory_space<vmem>>, vector<16x128xf32>
    tpu.vector_store %arg5[%c0_26, %c0_27], %51 {strides = array<i32>} : memref<16x128xf32, #tpu.memory_space<vmem>>, vector<16x128xf32>,
    return
  }
  func.func @transform_0(%arg0: i32) -> (i32, i32) {
    %c0_i32 = arith.constant 0 : i32
    %c0_i32_0 = arith.constant 0 : i32
    return %arg0, %c0_i32 : i32, i32
  }
  func.func @transform_1(%arg0: i32) -> (i32, i32) {
    %c0_i32 = arith.constant 0 : i32
    %c0_i32_0 = arith.constant 0 : i32
    %c0_i32_1 = arith.constant 0 : i32
    return %c0_i32, %c0_i32_0 : i32, i32
  }
  func.func @transform_2(%arg0: i32) -> (i32, i32) {
    %c0_i32 = arith.constant 0 : i32
    %c0_i32_0 = arith.constant 0 : i32
    %c0_i32_1 = arith.constant 0 : i32
    return %c0_i32, %c0_i32_0 : i32, i32
  }
  func.func @transform_3(%arg0: i32) -> (i32, i32) {
    %c0_i32 = arith.constant 0 : i32
    %c0_i32_0 = arith.constant 0 : i32
    %c0_i32_1 = arith.constant 0 : i32
    return %c0_i32, %c0_i32_0 : i32, i32
  }
  func.func @transform_4(%arg0: i32) -> (i32, i32) {
    %c0_i32 = arith.constant 0 : i32
    %c0_i32_0 = arith.constant 0 : i32
    return %arg0, %c0_i32 : i32, i32
  }
}

</mosaic_0001>

<llo_original>
// kernel: forward.1
$region0: #{forward.1}
  #allocation0 [shape = 'u32[]', space=smem, size = 0x4, offset = 0x4, fixed_abs, tag = 'smem constant byte address 0x4 - core index']
  #allocation1 [shape = 'u32[144,128]{1,0:T(1,128)}', space=vmem, size = 0x12000, scoped, tag = 'internal scratch']
  %s0 = inlined_call_operand.vmem [shape: bf16[128,64], index: 0, kind: input, shape index: {}]
  %s1 = inlined_call_operand.vmem [shape: bf16[64,128], index: 1, kind: input, shape index: {}]
  %s2 = inlined_call_operand.vmem [shape: bf16[128,640], index: 2, kind: input, shape index: {}]
  %s3 = inlined_call_operand.vmem [shape: f32[1,384], index: 3, kind: input, shape index: {}]
  %s4 = inlined_call_operand.hbm [shape: f32[16,128], index: 4, kind: output, shape index: {}]
  %s5 = sld [smem:[#allocation0]]
  $region26: #{forward.1} parent=0
    _
  %s7 = ssub.s32 1, %s5
  %s8 = scalar_select 0, %s7, %s5
  $region1: #{forward.1} parent=0
    #allocation2 [shape = 'u8[8192]{0}', space=vmem, size = 0x2000, scoped, tag = 'output window, operand 0, single buffered']
    #allocation3 [shape = 's32[1]{0}', space=sflag, size = 0x4, scoped, tag = 'scoped memory for forward.1']
    %9 = vsyncpa [#allocation3], 0
    // Predicated region
    $region2: #{forward.1} parent=1 // pred_check
      _
    $region3: #{forward.1} parent=1 // pred_check_branch
      %11 = sbr.rel (0) target = $region5
    $region4: #{forward.1} parent=1 // pred_region
      _
    $region5: #{forward.1} parent=1 // pred_fallthru
      _
    // Predicated region
    $region6: #{forward.1} parent=1 // pred_check
      _
    $region7: #{forward.1} parent=1 // pred_check_branch
      %13 = sbr.rel (0) target = $region9
    $region8: #{forward.1} parent=1 // pred_region
      _
    $region9: #{forward.1} parent=1 // pred_fallthru
      _
    // Predicated region
    $region10: #{forward.1} parent=1 // pred_check
      _
    $region11: #{forward.1} parent=1 // pred_check_branch
      %15 = sbr.rel (0) target = $region13
    $region12: #{forward.1} parent=1 // pred_region
      _
    $region13: #{forward.1} parent=1 // pred_fallthru
      _
    // Predicated region
    $region14: #{forward.1} parent=1 // pred_check
      _
    $region15: #{forward.1} parent=1 // pred_check_branch
      %17 = sbr.rel (0) target = $region17
    $region16: #{forward.1} parent=1 // pred_region
      _
    $region17: #{forward.1} parent=1 // pred_fallthru
      _
    %v19 = vld [vmem:[%s0] sm:$0xf]
    %v20 = vld [vmem:[%s0 + $0x4] sm:$0xf]
    %v21 = vld [vmem:[%s0 + $0x8] sm:$0xf]
    %v22 = vld [vmem:[%s0 + $0xc] sm:$0xf]
    %v23 = vld [vmem:[%s0 + $0x10] sm:$0xf]
    %v24 = vld [vmem:[%s0 + $0x14] sm:$0xf]
    %v25 = vld [vmem:[%s0 + $0x18] sm:$0xf]
    %v26 = vld [vmem:[%s0 + $0x1c] sm:$0xf]
    %v27 = vld [vmem:[%s0 + $0x20] sm:$0xf]
    %v28 = vld [vmem:[%s0 + $0x24] sm:$0xf]
    %v29 = vld [vmem:[%s0 + $0x28] sm:$0xf]
    %v30 = vld [vmem:[%s0 + $0x2c] sm:$0xf]
    %v31 = vld [vmem:[%s0 + $0x30] sm:$0xf]
    %v32 = vld [vmem:[%s0 + $0x34] sm:$0xf]
    %v33 = vld [vmem:[%s0 + $0x38] sm:$0xf]
    %v34 = vld [vmem:[%s0 + $0x3c] sm:$0xf]
    %v35 = vld [vmem:[%s2] sm:$0xf]
    %v36 = vld [vmem:[%s2 + $0x14] sm:$0xf]
    %v37 = vld [vmem:[%s2 + $0x28] sm:$0xf]
    %v38 = vld [vmem:[%s2 + $0x3c] sm:$0xf]
    %v39 = vld [vmem:[%s2 + $0x50] sm:$0xf]
    %v40 = vld [vmem:[%s2 + $0x64] sm:$0xf]
    %v41 = vld [vmem:[%s2 + $0x78] sm:$0xf]
    %v42 = vld [vmem:[%s2 + $0x8c] sm:$0xf]
    %v43 = vld [vmem:[%s2 + $0xa0] sm:$0xf]
    %v44 = vld [vmem:[%s2 + $0xb4] sm:$0xf]
    %v45 = vld [vmem:[%s2 + $0xc8] sm:$0xf]
    %v46 = vld [vmem:[%s2 + $0xdc] sm:$0xf]
    %v47 = vld [vmem:[%s2 + $0xf0] sm:$0xf]
    %v48 = vld [vmem:[%s2 + $0x104] sm:$0xf]
    %v49 = vld [vmem:[%s2 + $0x118] sm:$0xf]
    %v50 = vld [vmem:[%s2 + $0x12c] sm:$0xf]
    %v51 = vld [vmem:[%s2 + $0x4] sm:$0xf]
    %v52 = vld [vmem:[%s2 + $0x18] sm:$0xf]
    %v53 = vld [vmem:[%s2 + $0x2c] sm:$0xf]
    %v54 = vld [vmem:[%s2 + $0x40] sm:$0xf]
    %v55 = vld [vmem:[%s2 + $0x54] sm:$0xf]
    %v56 = vld [vmem:[%s2 + $0x68] sm:$0xf]
    %v57 = vld [vmem:[%s2 + $0x7c] sm:$0xf]
    %v58 = vld [vmem:[%s2 + $0x90] sm:$0xf]
    %v59 = vld [vmem:[%s2 + $0xa4] sm:$0xf]
    %v60 = vld [vmem:[%s2 + $0xb8] sm:$0xf]
    %v61 = vld [vmem:[%s2 + $0xcc] sm:$0xf]
    %v62 = vld [vmem:[%s2 + $0xe0] sm:$0xf]
    %v63 = vld [vmem:[%s2 + $0xf4] sm:$0xf]
    %v64 = vld [vmem:[%s2 + $0x108] sm:$0xf]
    %v65 = vld [vmem:[%s2 + $0x11c] sm:$0xf]
    %v66 = vld [vmem:[%s2 + $0x130] sm:$0xf]
    %v67 = vld [vmem:[%s2 + $0x8] sm:$0xff]
    %v68 = vld [vmem:[%s2 + $0x1c] sm:$0xff]
    %v69 = vld [vmem:[%s2 + $0x30] sm:$0xff]
    %v70 = vld [vmem:[%s2 + $0x44] sm:$0xff]
    %v71 = vld [vmem:[%s2 + $0x58] sm:$0xff]
    %v72 = vld [vmem:[%s2 + $0x6c] sm:$0xff]
    %v73 = vld [vmem:[%s2 + $0x80] sm:$0xff]
    %v74 = vld [vmem:[%s2 + $0x94] sm:$0xff]
    %v75 = vld [vmem:[%s2 + $0xa8] sm:$0xff]
    %v76 = vld [vmem:[%s2 + $0xbc] sm:$0xff]
    %v77 = vld [vmem:[%s2 + $0xd0] sm:$0xff]
    %v78 = vld [vmem:[%s2 + $0xe4] sm:$0xff]
    %v79 = vld [vmem:[%s2 + $0xf8] sm:$0xff]
    %v80 = vld [vmem:[%s2 + $0x10c] sm:$0xff]
    %v81 = vld [vmem:[%s2 + $0x120] sm:$0xff]
    %v82 = vld [vmem:[%s2 + $0x134] sm:$0xff]
    %v83 = vld [vmem:[%s2 + $0x10] sm:$0xf]
    %v84 = vld [vmem:[%s2 + $0x24] sm:$0xf]
    %v85 = vld [vmem:[%s2 + $0x38] sm:$0xf]
    %v86 = vld [vmem:[%s2 + $0x4c] sm:$0xf]
    %v87 = vld [vmem:[%s2 + $0x60] sm:$0xf]
    %v88 = vld [vmem:[%s2 + $0x74] sm:$0xf]
    %v89 = vld [vmem:[%s2 + $0x88] sm:$0xf]
    %v90 = vld [vmem:[%s2 + $0x9c] sm:$0xf]
    %v91 = vld [vmem:[%s2 + $0xb0] sm:$0xf]
    %v92 = vld [vmem:[%s2 + $0xc4] sm:$0xf]
    %v93 = vld [vmem:[%s2 + $0xd8] sm:$0xf]
    %v94 = vld [vmem:[%s2 + $0xec] sm:$0xf]
    %v95 = vld [vmem:[%s2 + $0x100] sm:$0xf]
    %v96 = vld [vmem:[%s2 + $0x114] sm:$0xf]
    %v97 = vld [vmem:[%s2 + $0x128] sm:$0xf]
    %v98 = vld [vmem:[%s2 + $0x13c] sm:$0xf]
    %v99 = vld [vmem:[%s3] sm:$0x3]
    %v100 = vld [vmem:[%s3 + $0x2] sm:$0x1]
    %v101 = vld [vmem:[%s1] sm:$0xf]
    %v102 = vld [vmem:[%s1 + $0x4] sm:$0xf]
    %v103 = vld [vmem:[%s1 + $0x8] sm:$0xf]
    %v104 = vld [vmem:[%s1 + $0xc] sm:$0xf]
    %v105 = vld [vmem:[%s1 + $0x10] sm:$0xf]
    %v106 = vld [vmem:[%s1 + $0x14] sm:$0xf]
    %v107 = vld [vmem:[%s1 + $0x18] sm:$0xf]
    %v108 = vld [vmem:[%s1 + $0x1c] sm:$0xf]
    %v125 = vunpack.c.l.b16 %v19
    %v126 = vunpack.c.l.b16 %v20
    %v127 = vunpack.c.l.b16 %v21
    %v128 = vunpack.c.l.b16 %v22
    %v129 = vunpack.c.l.b16 %v23
    %v130 = vunpack.c.l.b16 %v24
    %v131 = vunpack.c.l.b16 %v25
    %v132 = vunpack.c.l.b16 %v26
    %v133 = vunpack.c.l.b16 %v27
    %v134 = vunpack.c.l.b16 %v28
    %v135 = vunpack.c.l.b16 %v29
    %v136 = vunpack.c.l.b16 %v30
    %v137 = vunpack.c.l.b16 %v31
    %v138 = vunpack.c.l.b16 %v32
    %v139 = vunpack.c.l.b16 %v33
    %v140 = vunpack.c.l.b16 %v34
    %v141 = vpack.c.b16 %v126, %v125
    %v142 = vpack.c.b16 %v128, %v127
    %v143 = vpack.c.b16 %v130, %v129
    %v144 = vpack.c.b16 %v132, %v131
    %v145 = vpack.c.b16 %v134, %v133
    %v146 = vpack.c.b16 %v136, %v135
    %v147 = vpack.c.b16 %v138, %v137
    %v148 = vpack.c.b16 %v140, %v139
    %v157 = vunpack.c.l.b16 %v101
    %v158 = vunpack.c.l.b16 %v102
    %v159 = vunpack.c.l.b16 %v103
    %v160 = vunpack.c.l.b16 %v104
    %v161 = vunpack.c.l.b16 %v105
    %v162 = vunpack.c.l.b16 %v106
    %v163 = vunpack.c.l.b16 %v107
    %v164 = vunpack.c.l.b16 %v108
    %v165 = vpack.c.b16 %v158, %v157
    %v166 = vpack.c.b16 %v160, %v159
    %v167 = vpack.c.b16 %v162, %v161
    %v168 = vpack.c.b16 %v164, %v163
    %vm173 = vcmask 523264
    %v175 = vsel %vm173, %v141, 0
    %v178 = vsel %vm173, %v142, 0
    %v181 = vsel %vm173, %v143, 0
    %v184 = vsel %vm173, %v144, 0
    %v187 = vsel %vm173, %v145, 0
    %v190 = vsel %vm173, %v146, 0
    %v193 = vsel %vm173, %v147, 0
    %v196 = vsel %vm173, %v148, 0
    %198 = vmatprep.subr.bf16.mxu0 0
    %199 = vmatpush1.bf16.msra.mxu0 %v165
    %200 = vmatprep.subr.bf16.mxu0 0
    %201 = vmatpush1.bf16.msra.mxu0 %v166
    %202 = vmatprep.subr.bf16.mxu0 0
    %203 = vmatpush1.bf16.msra.mxu0 %v167
    %204 = vmatprep.subr.bf16.mxu0 0
    %205 = vmatpush1.bf16.msra.mxu0 %v168
    %206 = vmatprep.subr.bf16.mxu0 0
    %207 = vmatpush1.bf16.msra.mxu0 0
    %208 = vmatprep.subr.bf16.mxu0 0
    %209 = vmatpush1.bf16.msra.mxu0 0
    %210 = vmatprep.subr.bf16.mxu0 0
    %211 = vmatpush1.bf16.msra.mxu0 0
    %212 = vmatprep.subr.bf16.mxu0 0
    %213 = vmatpush1.bf16.msra.mxu0 0
    %214 = vmatprep.subr.bf16.mxu0 0
    %215 = vmatpush1.bf16.msra.mxu0 0
    %216 = vmatprep.subr.bf16.mxu0 0
    %217 = vmatpush1.bf16.msra.mxu0 0
    %218 = vmatprep.subr.bf16.mxu0 0
    %219 = vmatpush1.bf16.msra.mxu0 0
    %220 = vmatprep.subr.bf16.mxu0 0
    %221 = vmatpush1.bf16.msra.mxu0 0
    %222 = vmatprep.subr.bf16.mxu0 0
    %223 = vmatpush1.bf16.msra.mxu0 0
    %224 = vmatprep.subr.bf16.mxu0 0
    %225 = vmatpush1.bf16.msra.mxu0 0
    %226 = vmatprep.subr.bf16.mxu0 0
    %227 = vmatpush1.bf16.msra.mxu0 0
    %228 = vmatprep.subr.bf16.mxu0 0
    %229 = vmatpush1.bf16.msra.mxu0 0
    %230 = vmatprep.mubr.bf16.mxu0 0
    %231 = vmatmul.mubr.bf16.gmra.mrb[0].mxu0 %v175
    %v232 = vpop.f32.mrb[0].mxu0
    %v233 = vadd.f32 0.0, %v232
    %v234 = vpop.f32.mrb[0].mxu0
    %v235 = vpop.f32.mrb[0].mxu0
    %v236 = vadd.f32 0.0, %v235
    %v237 = vpop.f32.mrb[0].mxu0
    %238 = vmatprep.mubr.bf16.mxu0 0
    %239 = vmatmul.mubr.bf16.gmra.mrb[0].mxu0 %v178
    %v240 = vpop.f32.mrb[0].mxu0
    %v241 = vadd.f32 0.0, %v240
    %v242 = vpop.f32.mrb[0].mxu0
    %v243 = vpop.f32.mrb[0].mxu0
    %v244 = vadd.f32 0.0, %v243
    %v245 = vpop.f32.mrb[0].mxu0
    %246 = vmatprep.mubr.bf16.mxu0 0
    %247 = vmatmul.mubr.bf16.gmra.mrb[0].mxu0 %v181
    %v248 = vpop.f32.mrb[0].mxu0
    %v249 = vadd.f32 0.0, %v248
    %v250 = vpop.f32.mrb[0].mxu0
    %v251 = vpop.f32.mrb[0].mxu0
    %v252 = vadd.f32 0.0, %v251
    %v253 = vpop.f32.mrb[0].mxu0
    %254 = vmatprep.mubr.bf16.mxu0 0
    %255 = vmatmul.mubr.bf16.gmra.mrb[0].mxu0 %v184
    %v256 = vpop.f32.mrb[0].mxu0
    %v257 = vadd.f32 0.0, %v256
    %v258 = vpop.f32.mrb[0].mxu0
    %v259 = vpop.f32.mrb[0].mxu0
    %v260 = vadd.f32 0.0, %v259
    %v261 = vpop.f32.mrb[0].mxu0
    %262 = vmatprep.mubr.bf16.mxu0 0
    %263 = vmatmul.mubr.bf16.gmra.mrb[0].mxu0 %v187
    %v264 = vpop.f32.mrb[0].mxu0
    %v265 = vadd.f32 0.0, %v264
    %v266 = vpop.f32.mrb[0].mxu0
    %v267 = vpop.f32.mrb[0].mxu0
    %v268 = vadd.f32 0.0, %v267
    %v269 = vpop.f32.mrb[0].mxu0
    %270 = vmatprep.mubr.bf16.mxu0 0
    %271 = vmatmul.mubr.bf16.gmra.mrb[0].mxu0 %v190
    %v272 = vpop.f32.mrb[0].mxu0
    %v273 = vadd.f32 0.0, %v272
    %v274 = vpop.f32.mrb[0].mxu0
    %v275 = vpop.f32.mrb[0].mxu0
    %v276 = vadd.f32 0.0, %v275
    %v277 = vpop.f32.mrb[0].mxu0
    %278 = vmatprep.mubr.bf16.mxu0 0
    %279 = vmatmul.mubr.bf16.gmra.mrb[0].mxu0 %v193
    %v280 = vpop.f32.mrb[0].mxu0
    %v281 = vadd.f32 0.0, %v280
    %v282 = vpop.f32.mrb[0].mxu0
    %v283 = vpop.f32.mrb[0].mxu0
    %v284 = vadd.f32 0.0, %v283
    %v285 = vpop.f32.mrb[0].mxu0
    %286 = vmatprep.mubr.bf16.mxu0 0
    %287 = vmatmul.mubr.bf16.gmra.mrb[0].mxu0 %v196
    %v288 = vpop.f32.mrb[0].mxu0
    %v289 = vadd.f32 0.0, %v288
    %v290 = vpop.f32.mrb[0].mxu0
    %v291 = vpop.f32.mrb[0].mxu0
    %v292 = vadd.f32 0.0, %v291
    %v293 = vpop.f32.mrb[0].mxu0
    %294 = vdwg.mxu0
    %v295 = vmax.f32 %v233, 0.0
    %v296 = vmax.f32 %v236, 0.0
    %v297 = vmax.f32 %v241, 0.0
    %v298 = vmax.f32 %v244, 0.0
    %v299 = vmax.f32 %v249, 0.0
    %v300 = vmax.f32 %v252, 0.0
    %v301 = vmax.f32 %v257, 0.0
    %v302 = vmax.f32 %v260, 0.0
    %v303 = vmax.f32 %v265, 0.0
    %v304 = vmax.f32 %v268, 0.0
    %v305 = vmax.f32 %v273, 0.0
    %v306 = vmax.f32 %v276, 0.0
    %v307 = vmax.f32 %v281, 0.0
    %v308 = vmax.f32 %v284, 0.0
    %v309 = vmax.f32 %v289, 0.0
    %v310 = vmax.f32 %v292, 0.0
    %v311 = vpack.c.bf16 %v296, %v295
    %v312 = vpack.c.bf16 %v298, %v297
    %v313 = vpack.c.bf16 %v300, %v299
    %v314 = vpack.c.bf16 %v302, %v301
    %v315 = vpack.c.bf16 %v304, %v303
    %v316 = vpack.c.bf16 %v306, %v305
    %v317 = vpack.c.bf16 %v308, %v307
    %v318 = vpack.c.bf16 %v310, %v309
    %v335 = vunpack.c.l.b16 %v35
    %v336 = vunpack.c.l.b16 %v36
    %v337 = vunpack.c.l.b16 %v37
    %v338 = vunpack.c.l.b16 %v38
    %v339 = vunpack.c.l.b16 %v39
    %v340 = vunpack.c.l.b16 %v40
    %v341 = vunpack.c.l.b16 %v41
    %v342 = vunpack.c.l.b16 %v42
    %v343 = vunpack.c.l.b16 %v43
    %v344 = vunpack.c.l.b16 %v44
    %v345 = vunpack.c.l.b16 %v45
    %v346 = vunpack.c.l.b16 %v46
    %v347 = vunpack.c.l.b16 %v47
    %v348 = vunpack.c.l.b16 %v48
    %v349 = vunpack.c.l.b16 %v49
    %v350 = vunpack.c.l.b16 %v50
    %v351 = vpack.c.b16 %v336, %v335
    %v352 = vpack.c.b16 %v338, %v337
    %v353 = vpack.c.b16 %v340, %v339
    %v354 = vpack.c.b16 %v342, %v341
    %v355 = vpack.c.b16 %v344, %v343
    %v356 = vpack.c.b16 %v346, %v345
    %v357 = vpack.c.b16 %v348, %v347
    %v358 = vpack.c.b16 %v350, %v349
    %367 = vmatprep.subr.bf16.mxu0 0
    %368 = vmatpush1.bf16.msra.mxu0 %v351
    %369 = vmatprep.subr.bf16.mxu0 0
    %370 = vmatpush1.bf16.msra.mxu0 %v352
    %371 = vmatprep.subr.bf16.mxu0 0
    %372 = vmatpush1.bf16.msra.mxu0 %v353
    %373 = vmatprep.subr.bf16.mxu0 0
    %374 = vmatpush1.bf16.msra.mxu0 %v354
    %375 = vmatprep.subr.bf16.mxu0 0
    %376 = vmatpush1.bf16.msra.mxu0 %v355
    %377 = vmatprep.subr.bf16.mxu0 0
    %378 = vmatpush1.bf16.msra.mxu0 %v356
    %379 = vmatprep.subr.bf16.mxu0 0
    %380 = vmatpush1.bf16.msra.mxu0 %v357
    %381 = vmatprep.subr.bf16.mxu0 0
    %382 = vmatpush1.bf16.msra.mxu0 %v358
    %383 = vmatprep.subr.bf16.mxu0 0
    %384 = vmatpush1.bf16.msra.mxu0 0
    %385 = vmatprep.subr.bf16.mxu0 0
    %386 = vmatpush1.bf16.msra.mxu0 0
    %387 = vmatprep.subr.bf16.mxu0 0
    %388 = vmatpush1.bf16.msra.mxu0 0
    %389 = vmatprep.subr.bf16.mxu0 0
    %390 = vmatpush1.bf16.msra.mxu0 0
    %391 = vmatprep.subr.bf16.mxu0 0
    %392 = vmatpush1.bf16.msra.mxu0 0
    %393 = vmatprep.subr.bf16.mxu0 0
    %394 = vmatpush1.bf16.msra.mxu0 0
    %395 = vmatprep.subr.bf16.mxu0 0
    %396 = vmatpush1.bf16.msra.mxu0 0
    %397 = vmatprep.subr.bf16.mxu0 0
    %398 = vmatpush1.bf16.msra.mxu0 0
    %399 = vmatprep.mubr.bf16.mxu0 0
    %400 = vmatmul.mubr.bf16.gmra.mrb[0].mxu0 %v311
    %v401 = vpop.f32.mrb[0].mxu0
    %v402 = vadd.f32 0.0, %v401
    %v403 = vpop.f32.mrb[0].mxu0
    %v404 = vpop.f32.mrb[0].mxu0
    %v405 = vadd.f32 0.0, %v404
    %v406 = vpop.f32.mrb[0].mxu0
    %407 = vmatprep.mubr.bf16.mxu0 0
    %408 = vmatmul.mubr.bf16.gmra.mrb[0].mxu0 %v312
    %v409 = vpop.f32.mrb[0].mxu0
    %v410 = vadd.f32 0.0, %v409
    %v411 = vpop.f32.mrb[0].mxu0
    %v412 = vpop.f32.mrb[0].mxu0
    %v413 = vadd.f32 0.0, %v412
    %v414 = vpop.f32.mrb[0].mxu0
    %415 = vmatprep.mubr.bf16.mxu0 0
    %416 = vmatmul.mubr.bf16.gmra.mrb[0].mxu0 %v313
    %v417 = vpop.f32.mrb[0].mxu0
    %v418 = vadd.f32 0.0, %v417
    %v419 = vpop.f32.mrb[0].mxu0
    %v420 = vpop.f32.mrb[0].mxu0
    %v421 = vadd.f32 0.0, %v420
    %v422 = vpop.f32.mrb[0].mxu0
    %423 = vmatprep.mubr.bf16.mxu0 0
    %424 = vmatmul.mubr.bf16.gmra.mrb[0].mxu0 %v314
    %v425 = vpop.f32.mrb[0].mxu0
    %v426 = vadd.f32 0.0, %v425
    %v427 = vpop.f32.mrb[0].mxu0
    %v428 = vpop.f32.mrb[0].mxu0
    %v429 = vadd.f32 0.0, %v428
    %v430 = vpop.f32.mrb[0].mxu0
    %431 = vmatprep.mubr.bf16.mxu0 0
    %432 = vmatmul.mubr.bf16.gmra.mrb[0].mxu0 %v315
    %v433 = vpop.f32.mrb[0].mxu0
    %v434 = vadd.f32 0.0, %v433
    %v435 = vpop.f32.mrb[0].mxu0
    %v436 = vpop.f32.mrb[0].mxu0
    %v437 = vadd.f32 0.0, %v436
    %v438 = vpop.f32.mrb[0].mxu0
    %439 = vmatprep.mubr.bf16.mxu0 0
    %440 = vmatmul.mubr.bf16.gmra.mrb[0].mxu0 %v316
    %v441 = vpop.f32.mrb[0].mxu0
    %v442 = vadd.f32 0.0, %v441
    %v443 = vpop.f32.mrb[0].mxu0
    %v444 = vpop.f32.mrb[0].mxu0
    %v445 = vadd.f32 0.0, %v444
    %v446 = vpop.f32.mrb[0].mxu0
    %447 = vmatprep.mubr.bf16.mxu0 0
    %448 = vmatmul.mubr.bf16.gmra.mrb[0].mxu0 %v317
    %v449 = vpop.f32.mrb[0].mxu0
    %v450 = vadd.f32 0.0, %v449
    %v451 = vpop.f32.mrb[0].mxu0
    %v452 = vpop.f32.mrb[0].mxu0
    %v453 = vadd.f32 0.0, %v452
    %v454 = vpop.f32.mrb[0].mxu0
    %455 = vmatprep.mubr.bf16.mxu0 0
    %456 = vmatmul.mubr.bf16.gmra.mrb[0].mxu0 %v318
    %v457 = vpop.f32.mrb[0].mxu0
    %v458 = vadd.f32 0.0, %v457
    %v459 = vpop.f32.mrb[0].mxu0
    %v460 = vpop.f32.mrb[0].mxu0
    %v461 = vadd.f32 0.0, %v460
    %v462 = vpop.f32.mrb[0].mxu0
    %463 = vdwg.mxu0
    %v464 = vmax.f32 %v402, 0.0
    %v465 = vmax.f32 %v405, 0.0
    %v466 = vmax.f32 %v410, 0.0
    %v467 = vmax.f32 %v413, 0.0
    %v468 = vmax.f32 %v418, 0.0
    %v469 = vmax.f32 %v421, 0.0
    %v470 = vmax.f32 %v426, 0.0
    %v471 = vmax.f32 %v429, 0.0
    %v472 = vmax.f32 %v434, 0.0
    %v473 = vmax.f32 %v437, 0.0
    %v474 = vmax.f32 %v442, 0.0
    %v475 = vmax.f32 %v445, 0.0
    %v476 = vmax.f32 %v450, 0.0
    %v477 = vmax.f32 %v453, 0.0
    %v478 = vmax.f32 %v458, 0.0
    %v479 = vmax.f32 %v461, 0.0
    %v480 = vpack.c.bf16 %v465, %v464
    %v481 = vpack.c.bf16 %v467, %v466
    %v482 = vpack.c.bf16 %v469, %v468
    %v483 = vpack.c.bf16 %v471, %v470
    %v484 = vpack.c.bf16 %v473, %v472
    %v485 = vpack.c.bf16 %v475, %v474
    %v486 = vpack.c.bf16 %v477, %v476
    %v487 = vpack.c.bf16 %v479, %v478
    %v504 = vunpack.c.l.b16 %v51
    %v505 = vunpack.c.l.b16 %v52
    %v506 = vunpack.c.l.b16 %v53
    %v507 = vunpack.c.l.b16 %v54
    %v508 = vunpack.c.l.b16 %v55
    %v509 = vunpack.c.l.b16 %v56
    %v510 = vunpack.c.l.b16 %v57
    %v511 = vunpack.c.l.b16 %v58
    %v512 = vunpack.c.l.b16 %v59
    %v513 = vunpack.c.l.b16 %v60
    %v514 = vunpack.c.l.b16 %v61
    %v515 = vunpack.c.l.b16 %v62
    %v516 = vunpack.c.l.b16 %v63
    %v517 = vunpack.c.l.b16 %v64
    %v518 = vunpack.c.l.b16 %v65
    %v519 = vunpack.c.l.b16 %v66
    %v520 = vpack.c.b16 %v505, %v504
    %v521 = vpack.c.b16 %v507, %v506
    %v522 = vpack.c.b16 %v509, %v508
    %v523 = vpack.c.b16 %v511, %v510
    %v524 = vpack.c.b16 %v513, %v512
    %v525 = vpack.c.b16 %v515, %v514
    %v526 = vpack.c.b16 %v517, %v516
    %v527 = vpack.c.b16 %v519, %v518
    %536 = vmatprep.subr.bf16.mxu0 0
    %537 = vmatpush1.bf16.msra.mxu0 %v520
    %538 = vmatprep.subr.bf16.mxu0 0
    %539 = vmatpush1.bf16.msra.mxu0 %v521
    %540 = vmatprep.subr.bf16.mxu0 0
    %541 = vmatpush1.bf16.msra.mxu0 %v522
    %542 = vmatprep.subr.bf16.mxu0 0
    %543 = vmatpush1.bf16.msra.mxu0 %v523
    %544 = vmatprep.subr.bf16.mxu0 0
    %545 = vmatpush1.bf16.msra.mxu0 %v524
    %546 = vmatprep.subr.bf16.mxu0 0
    %547 = vmatpush1.bf16.msra.mxu0 %v525
    %548 = vmatprep.subr.bf16.mxu0 0
    %549 = vmatpush1.bf16.msra.mxu0 %v526
    %550 = vmatprep.subr.bf16.mxu0 0
    %551 = vmatpush1.bf16.msra.mxu0 %v527
    %552 = vmatprep.subr.bf16.mxu0 0
    %553 = vmatpush1.bf16.msra.mxu0 0
    %554 = vmatprep.subr.bf16.mxu0 0
    %555 = vmatpush1.bf16.msra.mxu0 0
    %556 = vmatprep.subr.bf16.mxu0 0
    %557 = vmatpush1.bf16.msra.mxu0 0
    %558 = vmatprep.subr.bf16.mxu0 0
    %559 = vmatpush1.bf16.msra.mxu0 0
    %560 = vmatprep.subr.bf16.mxu0 0
    %561 = vmatpush1.bf16.msra.mxu0 0
    %562 = vmatprep.subr.bf16.mxu0 0
    %563 = vmatpush1.bf16.msra.mxu0 0
    %564 = vmatprep.subr.bf16.mxu0 0
    %565 = vmatpush1.bf16.msra.mxu0 0
    %566 = vmatprep.subr.bf16.mxu0 0
    %567 = vmatpush1.bf16.msra.mxu0 0
    %568 = vmatprep.mubr.bf16.mxu0 0
    %569 = vmatmul.mubr.bf16.gmra.mrb[0].mxu0 %v480
    %v570 = vpop.f32.mrb[0].mxu0
    %v571 = vadd.f32 0.0, %v570
    %v572 = vpop.f32.mrb[0].mxu0
    %v573 = vpop.f32.mrb[0].mxu0
    %v574 = vadd.f32 0.0, %v573
    %v575 = vpop.f32.mrb[0].mxu0
    %576 = vmatprep.mubr.bf16.mxu0 0
    %577 = vmatmul.mubr.bf16.gmra.mrb[0].mxu0 %v481
    %v578 = vpop.f32.mrb[0].mxu0
    %v579 = vadd.f32 0.0, %v578
    %v580 = vpop.f32.mrb[0].mxu0
    %v581 = vpop.f32.mrb[0].mxu0
    %v582 = vadd.f32 0.0, %v581
    %v583 = vpop.f32.mrb[0].mxu0
    %584 = vmatprep.mubr.bf16.mxu0 0
    %585 = vmatmul.mubr.bf16.gmra.mrb[0].mxu0 %v482
    %v586 = vpop.f32.mrb[0].mxu0
    %v587 = vadd.f32 0.0, %v586
    %v588 = vpop.f32.mrb[0].mxu0
    %v589 = vpop.f32.mrb[0].mxu0
    %v590 = vadd.f32 0.0, %v589
    %v591 = vpop.f32.mrb[0].mxu0
    %592 = vmatprep.mubr.bf16.mxu0 0
    %593 = vmatmul.mubr.bf16.gmra.mrb[0].mxu0 %v483
    %v594 = vpop.f32.mrb[0].mxu0
    %v595 = vadd.f32 0.0, %v594
    %v596 = vpop.f32.mrb[0].mxu0
    %v597 = vpop.f32.mrb[0].mxu0
    %v598 = vadd.f32 0.0, %v597
    %v599 = vpop.f32.mrb[0].mxu0
    %600 = vmatprep.mubr.bf16.mxu0 0
    %601 = vmatmul.mubr.bf16.gmra.mrb[0].mxu0 %v484
    %v602 = vpop.f32.mrb[0].mxu0
    %v603 = vadd.f32 0.0, %v602
    %v604 = vpop.f32.mrb[0].mxu0
    %v605 = vpop.f32.mrb[0].mxu0
    %v606 = vadd.f32 0.0, %v605
    %v607 = vpop.f32.mrb[0].mxu0
    %608 = vmatprep.mubr.bf16.mxu0 0
    %609 = vmatmul.mubr.bf16.gmra.mrb[0].mxu0 %v485
    %v610 = vpop.f32.mrb[0].mxu0
    %v611 = vadd.f32 0.0, %v610
    %v612 = vpop.f32.mrb[0].mxu0
    %v613 = vpop.f32.mrb[0].mxu0
    %v614 = vadd.f32 0.0, %v613
    %v615 = vpop.f32.mrb[0].mxu0
    %616 = vmatprep.mubr.bf16.mxu0 0
    %617 = vmatmul.mubr.bf16.gmra.mrb[0].mxu0 %v486
    %v618 = vpop.f32.mrb[0].mxu0
    %v619 = vadd.f32 0.0, %v618
    %v620 = vpop.f32.mrb[0].mxu0
    %v621 = vpop.f32.mrb[0].mxu0
    %v622 = vadd.f32 0.0, %v621
    %v623 = vpop.f32.mrb[0].mxu0
    %624 = vmatprep.mubr.bf16.mxu0 0
    %625 = vmatmul.mubr.bf16.gmra.mrb[0].mxu0 %v487
    %v626 = vpop.f32.mrb[0].mxu0
    %v627 = vadd.f32 0.0, %v626
    %v628 = vpop.f32.mrb[0].mxu0
    %v629 = vpop.f32.mrb[0].mxu0
    %v630 = vadd.f32 0.0, %v629
    %v631 = vpop.f32.mrb[0].mxu0
    %632 = vdwg.mxu0
    %v633 = vmax.f32 %v571, 0.0
    %v634 = vmax.f32 %v574, 0.0
    %v635 = vmax.f32 %v579, 0.0
    %v636 = vmax.f32 %v582, 0.0
    %v637 = vmax.f32 %v587, 0.0
    %v638 = vmax.f32 %v590, 0.0
    %v639 = vmax.f32 %v595, 0.0
    %v640 = vmax.f32 %v598, 0.0
    %v641 = vmax.f32 %v603, 0.0
    %v642 = vmax.f32 %v606, 0.0
    %v643 = vmax.f32 %v611, 0.0
    %v644 = vmax.f32 %v614, 0.0
    %v645 = vmax.f32 %v619, 0.0
    %v646 = vmax.f32 %v622, 0.0
    %v647 = vmax.f32 %v627, 0.0
    %v648 = vmax.f32 %v630, 0.0
    %v649 = vpack.c.bf16 %v634, %v633
    %v650 = vpack.c.bf16 %v636, %v635
    %v651 = vpack.c.bf16 %v638, %v637
    %v652 = vpack.c.bf16 %v640, %v639
    %v653 = vpack.c.bf16 %v642, %v641
    %v654 = vpack.c.bf16 %v644, %v643
    %v655 = vpack.c.bf16 %v646, %v645
    %v656 = vpack.c.bf16 %v648, %v647
    %v658 = vlaneseq
    %v659 = vshrl.u32 %v658, 7
    %v660 = vsub.s32 0, %v659
    %v661 = vrot.slane %v99, %v660
    %v662 = vlaneseq
    %v663 = vshrl.u32 %v662, 7
    %v664 = vsub.s32 1, %v663
    %v665 = vrot.slane %v99, %v664
    %v684 = vunpack.c.l.b16 %v67
    %v685 = vunpack.c.h.b16 %v67
    %v686 = vunpack.c.l.b16 %v68
    %v687 = vunpack.c.h.b16 %v68
    %v688 = vunpack.c.l.b16 %v69
    %v689 = vunpack.c.h.b16 %v69
    %v690 = vunpack.c.l.b16 %v70
    %v691 = vunpack.c.h.b16 %v70
    %v692 = vunpack.c.l.b16 %v71
    %v693 = vunpack.c.h.b16 %v71
    %v694 = vunpack.c.l.b16 %v72
    %v695 = vunpack.c.h.b16 %v72
    %v696 = vunpack.c.l.b16 %v73
    %v697 = vunpack.c.h.b16 %v73
    %v698 = vunpack.c.l.b16 %v74
    %v699 = vunpack.c.h.b16 %v74
    %v700 = vunpack.c.l.b16 %v75
    %v701 = vunpack.c.h.b16 %v75
    %v702 = vunpack.c.l.b16 %v76
    %v703 = vunpack.c.h.b16 %v76
    %v704 = vunpack.c.l.b16 %v77
    %v705 = vunpack.c.h.b16 %v77
    %v706 = vunpack.c.l.b16 %v78
    %v707 = vunpack.c.h.b16 %v78
    %v708 = vunpack.c.l.b16 %v79
    %v709 = vunpack.c.h.b16 %v79
    %v710 = vunpack.c.l.b16 %v80
    %v711 = vunpack.c.h.b16 %v80
    %v712 = vunpack.c.l.b16 %v81
    %v713 = vunpack.c.h.b16 %v81
    %v714 = vunpack.c.l.b16 %v82
    %v715 = vunpack.c.h.b16 %v82
    %v716 = vpack.c.b16 %v686, %v684
    %v717 = vpack.c.b16 %v687, %v685
    %v718 = vpack.c.b16 %v690, %v688
    %v719 = vpack.c.b16 %v691, %v689
    %v720 = vpack.c.b16 %v694, %v692
    %v721 = vpack.c.b16 %v695, %v693
    %v722 = vpack.c.b16 %v698, %v696
    %v723 = vpack.c.b16 %v699, %v697
    %v724 = vpack.c.b16 %v702, %v700
    %v725 = vpack.c.b16 %v703, %v701
    %v726 = vpack.c.b16 %v706, %v704
    %v727 = vpack.c.b16 %v707, %v705
    %v728 = vpack.c.b16 %v710, %v708
    %v729 = vpack.c.b16 %v711, %v709
    %v730 = vpack.c.b16 %v714, %v712
    %v731 = vpack.c.b16 %v715, %v713
    %748 = vmatprep.subr.bf16.mxu0 %v717
    %749 = vmatpush1.bf16.msra.mxu0 %v716
    %750 = vmatprep.subr.bf16.mxu0 %v719
    %751 = vmatpush1.bf16.msra.mxu0 %v718
    %752 = vmatprep.subr.bf16.mxu0 %v721
    %753 = vmatpush1.bf16.msra.mxu0 %v720
    %754 = vmatprep.subr.bf16.mxu0 %v723
    %755 = vmatpush1.bf16.msra.mxu0 %v722
    %756 = vmatprep.subr.bf16.mxu0 %v725
    %757 = vmatpush1.bf16.msra.mxu0 %v724
    %758 = vmatprep.subr.bf16.mxu0 %v727
    %759 = vmatpush1.bf16.msra.mxu0 %v726
    %760 = vmatprep.subr.bf16.mxu0 %v729
    %761 = vmatpush1.bf16.msra.mxu0 %v728
    %762 = vmatprep.subr.bf16.mxu0 %v731
    %763 = vmatpush1.bf16.msra.mxu0 %v730
    %764 = vmatprep.subr.bf16.mxu0 0
    %765 = vmatpush1.bf16.msra.mxu0 0
    %766 = vmatprep.subr.bf16.mxu0 0
    %767 = vmatpush1.bf16.msra.mxu0 0
    %768 = vmatprep.subr.bf16.mxu0 0
    %769 = vmatpush1.bf16.msra.mxu0 0
    %770 = vmatprep.subr.bf16.mxu0 0
    %771 = vmatpush1.bf16.msra.mxu0 0
    %772 = vmatprep.subr.bf16.mxu0 0
    %773 = vmatpush1.bf16.msra.mxu0 0
    %774 = vmatprep.subr.bf16.mxu0 0
    %775 = vmatpush1.bf16.msra.mxu0 0
    %776 = vmatprep.subr.bf16.mxu0 0
    %777 = vmatpush1.bf16.msra.mxu0 0
    %778 = vmatprep.subr.bf16.mxu0 0
    %779 = vmatpush1.bf16.msra.mxu0 0
    %780 = vmatprep.mubr.bf16.mxu0 0
    %781 = vmatmul.mubr.bf16.gmra.mrb[0].mxu0 %v649
    %v782 = vpop.f32.mrb[0].mxu0
    %v783 = vadd.f32 %v661, %v782
    %v784 = vpop.f32.mrb[0].mxu0
    %v785 = vadd.f32 %v665, %v784
    %v786 = vpop.f32.mrb[0].mxu0
    %v787 = vadd.f32 %v661, %v786
    %v788 = vpop.f32.mrb[0].mxu0
    %v789 = vadd.f32 %v665, %v788
    %790 = vmatprep.mubr.bf16.mxu0 0
    %791 = vmatmul.mubr.bf16.gmra.mrb[0].mxu0 %v650
    %v792 = vpop.f32.mrb[0].mxu0
    %v793 = vadd.f32 %v661, %v792
    %v794 = vpop.f32.mrb[0].mxu0
    %v795 = vadd.f32 %v665, %v794
    %v796 = vpop.f32.mrb[0].mxu0
    %v797 = vadd.f32 %v661, %v796
    %v798 = vpop.f32.mrb[0].mxu0
    %v799 = vadd.f32 %v665, %v798
    %800 = vmatprep.mubr.bf16.mxu0 0
    %801 = vmatmul.mubr.bf16.gmra.mrb[0].mxu0 %v651
    %v802 = vpop.f32.mrb[0].mxu0
    %v803 = vadd.f32 %v661, %v802
    %v804 = vpop.f32.mrb[0].mxu0
    %v805 = vadd.f32 %v665, %v804
    %v806 = vpop.f32.mrb[0].mxu0
    %v807 = vadd.f32 %v661, %v806
    %v808 = vpop.f32.mrb[0].mxu0
    %v809 = vadd.f32 %v665, %v808
    %810 = vmatprep.mubr.bf16.mxu0 0
    %811 = vmatmul.mubr.bf16.gmra.mrb[0].mxu0 %v652
    %v812 = vpop.f32.mrb[0].mxu0
    %v813 = vadd.f32 %v661, %v812
    %v814 = vpop.f32.mrb[0].mxu0
    %v815 = vadd.f32 %v665, %v814
    %v816 = vpop.f32.mrb[0].mxu0
    %v817 = vadd.f32 %v661, %v816
    %v818 = vpop.f32.mrb[0].mxu0
    %v819 = vadd.f32 %v665, %v818
    %820 = vmatprep.mubr.bf16.mxu0 0
    %821 = vmatmul.mubr.bf16.gmra.mrb[0].mxu0 %v653
    %v822 = vpop.f32.mrb[0].mxu0
    %v823 = vadd.f32 %v661, %v822
    %v824 = vpop.f32.mrb[0].mxu0
    %v825 = vadd.f32 %v665, %v824
    %v826 = vpop.f32.mrb[0].mxu0
    %v827 = vadd.f32 %v661, %v826
    %v828 = vpop.f32.mrb[0].mxu0
    %v829 = vadd.f32 %v665, %v828
    %830 = vmatprep.mubr.bf16.mxu0 0
    %831 = vmatmul.mubr.bf16.gmra.mrb[0].mxu0 %v654
    %v832 = vpop.f32.mrb[0].mxu0
    %v833 = vadd.f32 %v661, %v832
    %v834 = vpop.f32.mrb[0].mxu0
    %v835 = vadd.f32 %v665, %v834
    %v836 = vpop.f32.mrb[0].mxu0
    %v837 = vadd.f32 %v661, %v836
    %v838 = vpop.f32.mrb[0].mxu0
    %v839 = vadd.f32 %v665, %v838
    %840 = vmatprep.mubr.bf16.mxu0 0
    %841 = vmatmul.mubr.bf16.gmra.mrb[0].mxu0 %v655
    %v842 = vpop.f32.mrb[0].mxu0
    %v843 = vadd.f32 %v661, %v842
    %v844 = vpop.f32.mrb[0].mxu0
    %v845 = vadd.f32 %v665, %v844
    %v846 = vpop.f32.mrb[0].mxu0
    %v847 = vadd.f32 %v661, %v846
    %v848 = vpop.f32.mrb[0].mxu0
    %v849 = vadd.f32 %v665, %v848
    %850 = vmatprep.mubr.bf16.mxu0 0
    %851 = vmatmul.mubr.bf16.gmra.mrb[0].mxu0 %v656
    %v852 = vpop.f32.mrb[0].mxu0
    %v853 = vadd.f32 %v661, %v852
    %v854 = vpop.f32.mrb[0].mxu0
    %v855 = vadd.f32 %v665, %v854
    %v856 = vpop.f32.mrb[0].mxu0
    %v857 = vadd.f32 %v661, %v856
    %v858 = vpop.f32.mrb[0].mxu0
    %v859 = vadd.f32 %v665, %v858
    %860 = vdwg.mxu0
    %v861 = vxor.u32 %v783, 2147483648
    %v862 = vxor.u32 %v787, 2147483648
    %v863 = vxor.u32 %v793, 2147483648
    %v864 = vxor.u32 %v797, 2147483648
    %v865 = vxor.u32 %v803, 2147483648
    %v866 = vxor.u32 %v807, 2147483648
    %v867 = vxor.u32 %v813, 2147483648
    %v868 = vxor.u32 %v817, 2147483648
    %v869 = vxor.u32 %v823, 2147483648
    %v870 = vxor.u32 %v827, 2147483648
    %v871 = vxor.u32 %v833, 2147483648
    %v872 = vxor.u32 %v837, 2147483648
    %v873 = vxor.u32 %v843, 2147483648
    %v874 = vxor.u32 %v847, 2147483648
    %v875 = vxor.u32 %v853, 2147483648
    %v876 = vxor.u32 %v857, 2147483648
    %v877 = vmul.f32 %v861, 1.442695
    %v878 = vpow.pop %v877
    %v879 = vmul.f32 %v862, 1.442695
    %v880 = vpow.pop %v879
    %v881 = vmul.f32 %v863, 1.442695
    %v882 = vpow.pop %v881
    %v883 = vmul.f32 %v864, 1.442695
    %v884 = vpow.pop %v883
    %v885 = vmul.f32 %v865, 1.442695
    %v886 = vpow.pop %v885
    %v887 = vmul.f32 %v866, 1.442695
    %v888 = vpow.pop %v887
    %v889 = vmul.f32 %v867, 1.442695
    %v890 = vpow.pop %v889
    %v891 = vmul.f32 %v868, 1.442695
    %v892 = vpow.pop %v891
    %v893 = vmul.f32 %v869, 1.442695
    %v894 = vpow.pop %v893
    %v895 = vmul.f32 %v870, 1.442695
    %v896 = vpow.pop %v895
    %v897 = vmul.f32 %v871, 1.442695
    %v898 = vpow.pop %v897
    %v899 = vmul.f32 %v872, 1.442695
    %v900 = vpow.pop %v899
    %v901 = vmul.f32 %v873, 1.442695
    %v902 = vpow.pop %v901
    %v903 = vmul.f32 %v874, 1.442695
    %v904 = vpow.pop %v903
    %v905 = vmul.f32 %v875, 1.442695
    %v906 = vpow.pop %v905
    %v907 = vmul.f32 %v876, 1.442695
    %v908 = vpow.pop %v907
    %v909 = vadd.f32 %v878, 1.0
    %v910 = vadd.f32 %v880, 1.0
    %v911 = vadd.f32 %v882, 1.0
    %v912 = vadd.f32 %v884, 1.0
    %v913 = vadd.f32 %v886, 1.0
    %v914 = vadd.f32 %v888, 1.0
    %v915 = vadd.f32 %v890, 1.0
    %v916 = vadd.f32 %v892, 1.0
    %v917 = vadd.f32 %v894, 1.0
    %v918 = vadd.f32 %v896, 1.0
    %v919 = vadd.f32 %v898, 1.0
    %v920 = vadd.f32 %v900, 1.0
    %v921 = vadd.f32 %v902, 1.0
    %v922 = vadd.f32 %v904, 1.0
    %v923 = vadd.f32 %v906, 1.0
    %v924 = vadd.f32 %v908, 1.0
    %v925 = vrcp.pop %v909
    %v926 = vmul.f32 1.0, %v925
    %v927 = vrcp.pop %v910
    %v928 = vmul.f32 1.0, %v927
    %v929 = vrcp.pop %v911
    %v930 = vmul.f32 1.0, %v929
    %v931 = vrcp.pop %v912
    %v932 = vmul.f32 1.0, %v931
    %v933 = vrcp.pop %v913
    %v934 = vmul.f32 1.0, %v933
    %v935 = vrcp.pop %v914
    %v936 = vmul.f32 1.0, %v935
    %v937 = vrcp.pop %v915
    %v938 = vmul.f32 1.0, %v937
    %v939 = vrcp.pop %v916
    %v940 = vmul.f32 1.0, %v939
    %v941 = vrcp.pop %v917
    %v942 = vmul.f32 1.0, %v941
    %v943 = vrcp.pop %v918
    %v944 = vmul.f32 1.0, %v943
    %v945 = vrcp.pop %v919
    %v946 = vmul.f32 1.0, %v945
    %v947 = vrcp.pop %v920
    %v948 = vmul.f32 1.0, %v947
    %v949 = vrcp.pop %v921
    %v950 = vmul.f32 1.0, %v949
    %v951 = vrcp.pop %v922
    %v952 = vmul.f32 1.0, %v951
    %v953 = vrcp.pop %v923
    %v954 = vmul.f32 1.0, %v953
    %v955 = vrcp.pop %v924
    %v956 = vmul.f32 1.0, %v955
    %v957 = vmax.f32 %v926, 1e-07
    %v958 = vmax.f32 %v928, 1e-07
    %v959 = vmax.f32 %v930, 1e-07
    %v960 = vmax.f32 %v932, 1e-07
    %v961 = vmax.f32 %v934, 1e-07
    %v962 = vmax.f32 %v936, 1e-07
    %v963 = vmax.f32 %v938, 1e-07
    %v964 = vmax.f32 %v940, 1e-07
    %v965 = vmax.f32 %v942, 1e-07
    %v966 = vmax.f32 %v944, 1e-07
    %v967 = vmax.f32 %v946, 1e-07
    %v968 = vmax.f32 %v948, 1e-07
    %v969 = vmax.f32 %v950, 1e-07
    %v970 = vmax.f32 %v952, 1e-07
    %v971 = vmax.f32 %v954, 1e-07
    %v972 = vmax.f32 %v956, 1e-07
    %v973 = vmin.f32 %v957, 0.9999999
    %v974 = vmin.f32 %v958, 0.9999999
    %v975 = vmin.f32 %v959, 0.9999999
    %v976 = vmin.f32 %v960, 0.9999999
    %v977 = vmin.f32 %v961, 0.9999999
    %v978 = vmin.f32 %v962, 0.9999999
    %v979 = vmin.f32 %v963, 0.9999999
    %v980 = vmin.f32 %v964, 0.9999999
    %v981 = vmin.f32 %v965, 0.9999999
    %v982 = vmin.f32 %v966, 0.9999999
    %v983 = vmin.f32 %v967, 0.9999999
    %v984 = vmin.f32 %v968, 0.9999999
    %v985 = vmin.f32 %v969, 0.9999999
    %v986 = vmin.f32 %v970, 0.9999999
    %v987 = vmin.f32 %v971, 0.9999999
    %v988 = vmin.f32 %v972, 0.9999999
    %v989 = vrot.slane %v973, 4
    %v990 = vadd.f32 %v973, %v989
    %v991 = vrot.slane %v990, 2
    %v992 = vadd.f32 %v990, %v991
    %v993 = vrot.slane %v992, 1
    %v994 = vadd.f32 %v992, %v993
    %v995 = vrot.slane %v974, 4
    %v996 = vadd.f32 %v974, %v995
    %v997 = vrot.slane %v996, 2
    %v998 = vadd.f32 %v996, %v997
    %v999 = vrot.slane %v998, 1
    %v1000 = vadd.f32 %v998, %v999
    %v1001 = vrot.slane %v975, 4
    %v1002 = vadd.f32 %v975, %v1001
    %v1003 = vrot.slane %v1002, 2
    %v1004 = vadd.f32 %v1002, %v1003
    %v1005 = vrot.slane %v1004, 1
    %v1006 = vadd.f32 %v1004, %v1005
    %v1007 = vrot.slane %v976, 4
    %v1008 = vadd.f32 %v976, %v1007
    %v1009 = vrot.slane %v1008, 2
    %v1010 = vadd.f32 %v1008, %v1009
    %v1011 = vrot.slane %v1010, 1
    %v1012 = vadd.f32 %v1010, %v1011
    %v1013 = vrot.slane %v977, 4
    %v1014 = vadd.f32 %v977, %v1013
    %v1015 = vrot.slane %v1014, 2
    %v1016 = vadd.f32 %v1014, %v1015
    %v1017 = vrot.slane %v1016, 1
    %v1018 = vadd.f32 %v1016, %v1017
    %v1019 = vrot.slane %v978, 4
    %v1020 = vadd.f32 %v978, %v1019
    %v1021 = vrot.slane %v1020, 2
    %v1022 = vadd.f32 %v1020, %v1021
    %v1023 = vrot.slane %v1022, 1
    %v1024 = vadd.f32 %v1022, %v1023
    %v1025 = vrot.slane %v979, 4
    %v1026 = vadd.f32 %v979, %v1025
    %v1027 = vrot.slane %v1026, 2
    %v1028 = vadd.f32 %v1026, %v1027
    %v1029 = vrot.slane %v1028, 1
    %v1030 = vadd.f32 %v1028, %v1029
    %v1031 = vrot.slane %v980, 4
    %v1032 = vadd.f32 %v980, %v1031
    %v1033 = vrot.slane %v1032, 2
    %v1034 = vadd.f32 %v1032, %v1033
    %v1035 = vrot.slane %v1034, 1
    %v1036 = vadd.f32 %v1034, %v1035
    %v1037 = vrot.slane %v981, 4
    %v1038 = vadd.f32 %v981, %v1037
    %v1039 = vrot.slane %v1038, 2
    %v1040 = vadd.f32 %v1038, %v1039
    %v1041 = vrot.slane %v1040, 1
    %v1042 = vadd.f32 %v1040, %v1041
    %v1043 = vrot.slane %v982, 4
    %v1044 = vadd.f32 %v982, %v1043
    %v1045 = vrot.slane %v1044, 2
    %v1046 = vadd.f32 %v1044, %v1045
    %v1047 = vrot.slane %v1046, 1
    %v1048 = vadd.f32 %v1046, %v1047
    %v1049 = vrot.slane %v983, 4
    %v1050 = vadd.f32 %v983, %v1049
    %v1051 = vrot.slane %v1050, 2
    %v1052 = vadd.f32 %v1050, %v1051
    %v1053 = vrot.slane %v1052, 1
    %v1054 = vadd.f32 %v1052, %v1053
    %v1055 = vrot.slane %v984, 4
    %v1056 = vadd.f32 %v984, %v1055
    %v1057 = vrot.slane %v1056, 2
    %v1058 = vadd.f32 %v1056, %v1057
    %v1059 = vrot.slane %v1058, 1
    %v1060 = vadd.f32 %v1058, %v1059
    %v1061 = vrot.slane %v985, 4
    %v1062 = vadd.f32 %v985, %v1061
    %v1063 = vrot.slane %v1062, 2
    %v1064 = vadd.f32 %v1062, %v1063
    %v1065 = vrot.slane %v1064, 1
    %v1066 = vadd.f32 %v1064, %v1065
    %v1067 = vrot.slane %v986, 4
    %v1068 = vadd.f32 %v986, %v1067
    %v1069 = vrot.slane %v1068, 2
    %v1070 = vadd.f32 %v1068, %v1069
    %v1071 = vrot.slane %v1070, 1
    %v1072 = vadd.f32 %v1070, %v1071
    %v1073 = vrot.slane %v987, 4
    %v1074 = vadd.f32 %v987, %v1073
    %v1075 = vrot.slane %v1074, 2
    %v1076 = vadd.f32 %v1074, %v1075
    %v1077 = vrot.slane %v1076, 1
    %v1078 = vadd.f32 %v1076, %v1077
    %v1079 = vrot.slane %v988, 4
    %v1080 = vadd.f32 %v988, %v1079
    %v1081 = vrot.slane %v1080, 2
    %v1082 = vadd.f32 %v1080, %v1081
    %v1083 = vrot.slane %v1082, 1
    %v1084 = vadd.f32 %v1082, %v1083
    %v1085 = vmul.f32 %v973, %v785
    %v1086 = vmul.f32 %v974, %v789
    %v1087 = vmul.f32 %v975, %v795
    %v1088 = vmul.f32 %v976, %v799
    %v1089 = vmul.f32 %v977, %v805
    %v1090 = vmul.f32 %v978, %v809
    %v1091 = vmul.f32 %v979, %v815
    %v1092 = vmul.f32 %v980, %v819
    %v1093 = vmul.f32 %v981, %v825
    %v1094 = vmul.f32 %v982, %v829
    %v1095 = vmul.f32 %v983, %v835
    %v1096 = vmul.f32 %v984, %v839
    %v1097 = vmul.f32 %v985, %v845
    %v1098 = vmul.f32 %v986, %v849
    %v1099 = vmul.f32 %v987, %v855
    %v1100 = vmul.f32 %v988, %v859
    %v1101 = vrot.slane %v1085, 4
    %v1102 = vadd.f32 %v1085, %v1101
    %v1103 = vrot.slane %v1102, 2
    %v1104 = vadd.f32 %v1102, %v1103
    %v1105 = vrot.slane %v1104, 1
    %v1106 = vadd.f32 %v1104, %v1105
    %v1107 = vrot.slane %v1086, 4
    %v1108 = vadd.f32 %v1086, %v1107
    %v1109 = vrot.slane %v1108, 2
    %v1110 = vadd.f32 %v1108, %v1109
    %v1111 = vrot.slane %v1110, 1
    %v1112 = vadd.f32 %v1110, %v1111
    %v1113 = vrot.slane %v1087, 4
    %v1114 = vadd.f32 %v1087, %v1113
    %v1115 = vrot.slane %v1114, 2
    %v1116 = vadd.f32 %v1114, %v1115
    %v1117 = vrot.slane %v1116, 1
    %v1118 = vadd.f32 %v1116, %v1117
    %v1119 = vrot.slane %v1088, 4
    %v1120 = vadd.f32 %v1088, %v1119
    %v1121 = vrot.slane %v1120, 2
    %v1122 = vadd.f32 %v1120, %v1121
    %v1123 = vrot.slane %v1122, 1
    %v1124 = vadd.f32 %v1122, %v1123
    %v1125 = vrot.slane %v1089, 4
    %v1126 = vadd.f32 %v1089, %v1125
    %v1127 = vrot.slane %v1126, 2
    %v1128 = vadd.f32 %v1126, %v1127
    %v1129 = vrot.slane %v1128, 1
    %v1130 = vadd.f32 %v1128, %v1129
    %v1131 = vrot.slane %v1090, 4
    %v1132 = vadd.f32 %v1090, %v1131
    %v1133 = vrot.slane %v1132, 2
    %v1134 = vadd.f32 %v1132, %v1133
    %v1135 = vrot.slane %v1134, 1
    %v1136 = vadd.f32 %v1134, %v1135
    %v1137 = vrot.slane %v1091, 4
    %v1138 = vadd.f32 %v1091, %v1137
    %v1139 = vrot.slane %v1138, 2
    %v1140 = vadd.f32 %v1138, %v1139
    %v1141 = vrot.slane %v1140, 1
    %v1142 = vadd.f32 %v1140, %v1141
    %v1143 = vrot.slane %v1092, 4
    %v1144 = vadd.f32 %v1092, %v1143
    %v1145 = vrot.slane %v1144, 2
    %v1146 = vadd.f32 %v1144, %v1145
    %v1147 = vrot.slane %v1146, 1
    %v1148 = vadd.f32 %v1146, %v1147
    %v1149 = vrot.slane %v1093, 4
    %v1150 = vadd.f32 %v1093, %v1149
    %v1151 = vrot.slane %v1150, 2
    %v1152 = vadd.f32 %v1150, %v1151
    %v1153 = vrot.slane %v1152, 1
    %v1154 = vadd.f32 %v1152, %v1153
    %v1155 = vrot.slane %v1094, 4
    %v1156 = vadd.f32 %v1094, %v1155
    %v1157 = vrot.slane %v1156, 2
    %v1158 = vadd.f32 %v1156, %v1157
    %v1159 = vrot.slane %v1158, 1
    %v1160 = vadd.f32 %v1158, %v1159
    %v1161 = vrot.slane %v1095, 4
    %v1162 = vadd.f32 %v1095, %v1161
    %v1163 = vrot.slane %v1162, 2
    %v1164 = vadd.f32 %v1162, %v1163
    %v1165 = vrot.slane %v1164, 1
    %v1166 = vadd.f32 %v1164, %v1165
    %v1167 = vrot.slane %v1096, 4
    %v1168 = vadd.f32 %v1096, %v1167
    %v1169 = vrot.slane %v1168, 2
    %v1170 = vadd.f32 %v1168, %v1169
    %v1171 = vrot.slane %v1170, 1
    %v1172 = vadd.f32 %v1170, %v1171
    %v1173 = vrot.slane %v1097, 4
    %v1174 = vadd.f32 %v1097, %v1173
    %v1175 = vrot.slane %v1174, 2
    %v1176 = vadd.f32 %v1174, %v1175
    %v1177 = vrot.slane %v1176, 1
    %v1178 = vadd.f32 %v1176, %v1177
    %v1179 = vrot.slane %v1098, 4
    %v1180 = vadd.f32 %v1098, %v1179
    %v1181 = vrot.slane %v1180, 2
    %v1182 = vadd.f32 %v1180, %v1181
    %v1183 = vrot.slane %v1182, 1
    %v1184 = vadd.f32 %v1182, %v1183
    %v1185 = vrot.slane %v1099, 4
    %v1186 = vadd.f32 %v1099, %v1185
    %v1187 = vrot.slane %v1186, 2
    %v1188 = vadd.f32 %v1186, %v1187
    %v1189 = vrot.slane %v1188, 1
    %v1190 = vadd.f32 %v1188, %v1189
    %v1191 = vrot.slane %v1100, 4
    %v1192 = vadd.f32 %v1100, %v1191
    %v1193 = vrot.slane %v1192, 2
    %v1194 = vadd.f32 %v1192, %v1193
    %v1195 = vrot.slane %v1194, 1
    %v1196 = vadd.f32 %v1194, %v1195
    %v1197 = vrcp.pop %v994
    %v1198 = vrcp.pop %v1000
    %v1199 = vrcp.pop %v1006
    %v1200 = vrcp.pop %v1012
    %v1201 = vrcp.pop %v1018
    %v1202 = vrcp.pop %v1024
    %v1203 = vrcp.pop %v1030
    %v1204 = vrcp.pop %v1036
    %v1205 = vrcp.pop %v1042
    %v1206 = vrcp.pop %v1048
    %v1207 = vrcp.pop %v1054
    %v1208 = vrcp.pop %v1060
    %v1209 = vrcp.pop %v1066
    %v1210 = vrcp.pop %v1072
    %v1211 = vrcp.pop %v1078
    %v1212 = vrcp.pop %v1084
    %v1213 = vmul.f32 %v1106, %v1197
    %v1214 = vmul.f32 %v1112, %v1198
    %v1215 = vmul.f32 %v1118, %v1199
    %v1216 = vmul.f32 %v1124, %v1200
    %v1217 = vmul.f32 %v1130, %v1201
    %v1218 = vmul.f32 %v1136, %v1202
    %v1219 = vmul.f32 %v1142, %v1203
    %v1220 = vmul.f32 %v1148, %v1204
    %v1221 = vmul.f32 %v1154, %v1205
    %v1222 = vmul.f32 %v1160, %v1206
    %v1223 = vmul.f32 %v1166, %v1207
    %v1224 = vmul.f32 %v1172, %v1208
    %v1225 = vmul.f32 %v1178, %v1209
    %v1226 = vmul.f32 %v1184, %v1210
    %v1227 = vmul.f32 %v1190, %v1211
    %v1228 = vmul.f32 %v1196, %v1212
    %v1229 = vmax.f32 %v1213, 0.0
    %v1230 = vmax.f32 %v1214, 0.0
    %v1231 = vmax.f32 %v1215, 0.0
    %v1232 = vmax.f32 %v1216, 0.0
    %v1233 = vmax.f32 %v1217, 0.0
    %v1234 = vmax.f32 %v1218, 0.0
    %v1235 = vmax.f32 %v1219, 0.0
    %v1236 = vmax.f32 %v1220, 0.0
    %v1237 = vmax.f32 %v1221, 0.0
    %v1238 = vmax.f32 %v1222, 0.0
    %v1239 = vmax.f32 %v1223, 0.0
    %v1240 = vmax.f32 %v1224, 0.0
    %v1241 = vmax.f32 %v1225, 0.0
    %v1242 = vmax.f32 %v1226, 0.0
    %v1243 = vmax.f32 %v1227, 0.0
    %v1244 = vmax.f32 %v1228, 0.0
    %v1245 = vpack.c.bf16 %v1229, %v1229
    %v1246 = vpack.c.bf16 %v1230, %v1230
    %v1247 = vpack.c.bf16 %v1231, %v1231
    %v1248 = vpack.c.bf16 %v1232, %v1232
    %v1249 = vpack.c.bf16 %v1233, %v1233
    %v1250 = vpack.c.bf16 %v1234, %v1234
    %v1251 = vpack.c.bf16 %v1235, %v1235
    %v1252 = vpack.c.bf16 %v1236, %v1236
    %v1253 = vpack.c.bf16 %v1237, %v1237
    %v1254 = vpack.c.bf16 %v1238, %v1238
    %v1255 = vpack.c.bf16 %v1239, %v1239
    %v1256 = vpack.c.bf16 %v1240, %v1240
    %v1257 = vpack.c.bf16 %v1241, %v1241
    %v1258 = vpack.c.bf16 %v1242, %v1242
    %v1259 = vpack.c.bf16 %v1243, %v1243
    %v1260 = vpack.c.bf16 %v1244, %v1244
    %v1262 = vlaneseq
    %v1263 = vshrl.u32 %v1262, 7
    %v1264 = vsub.s32 0, %v1263
    %v1265 = vrot.slane %v100, %v1264
    %v1283 = vunpack.c.l.b16 %v1245
    %v1284 = vunpack.c.l.b16 %v1246
    %v1285 = vunpack.c.l.b16 %v1247
    %v1286 = vunpack.c.l.b16 %v1248
    %v1287 = vunpack.c.l.b16 %v1249
    %v1288 = vunpack.c.l.b16 %v1250
    %v1289 = vunpack.c.l.b16 %v1251
    %v1290 = vunpack.c.l.b16 %v1252
    %v1291 = vunpack.c.l.b16 %v1253
    %v1292 = vunpack.c.l.b16 %v1254
    %v1293 = vunpack.c.l.b16 %v1255
    %v1294 = vunpack.c.l.b16 %v1256
    %v1295 = vunpack.c.l.b16 %v1257
    %v1296 = vunpack.c.l.b16 %v1258
    %v1297 = vunpack.c.l.b16 %v1259
    %v1298 = vunpack.c.l.b16 %v1260
    %vm1299 = vcmask 1041409
    %v1300 = vsel %vm1299, %v1284, %v1283
    %vm1301 = vcmask 1042434
    %v1302 = vsel %vm1301, %v1285, %v1300
    %vm1303 = vcmask 1043459
    %v1304 = vsel %vm1303, %v1286, %v1302
    %vm1305 = vcmask 1044484
    %v1306 = vsel %vm1305, %v1287, %v1304
    %vm1307 = vcmask 1045509
    %v1308 = vsel %vm1307, %v1288, %v1306
    %vm1309 = vcmask 1046534
    %v1310 = vsel %vm1309, %v1289, %v1308
    %vm1311 = vcmask 1047559
    %v1312 = vsel %vm1311, %v1290, %v1310
    %v1313 = vsel %vm1299, %v1292, %v1291
    %v1314 = vsel %vm1301, %v1293, %v1313
    %v1315 = vsel %vm1303, %v1294, %v1314
    %v1316 = vsel %vm1305, %v1295, %v1315
    %v1317 = vsel %vm1307, %v1296, %v1316
    %v1318 = vsel %vm1309, %v1297, %v1317
    %v1319 = vsel %vm1311, %v1298, %v1318
    %v1320 = vpack.c.b16 %v1319, %v1312
    %v1338 = vunpack.c.l.b16 %v83
    %v1339 = vunpack.c.l.b16 %v84
    %v1340 = vunpack.c.l.b16 %v85
    %v1341 = vunpack.c.l.b16 %v86
    %v1342 = vunpack.c.l.b16 %v87
    %v1343 = vunpack.c.l.b16 %v88
    %v1344 = vunpack.c.l.b16 %v89
    %v1345 = vunpack.c.l.b16 %v90
    %v1346 = vunpack.c.l.b16 %v91
    %v1347 = vunpack.c.l.b16 %v92
    %v1348 = vunpack.c.l.b16 %v93
    %v1349 = vunpack.c.l.b16 %v94
    %v1350 = vunpack.c.l.b16 %v95
    %v1351 = vunpack.c.l.b16 %v96
    %v1352 = vunpack.c.l.b16 %v97
    %v1353 = vunpack.c.l.b16 %v98
    %v1354 = vpack.c.b16 %v1339, %v1338
    %v1355 = vpack.c.b16 %v1341, %v1340
    %v1356 = vpack.c.b16 %v1343, %v1342
    %v1357 = vpack.c.b16 %v1345, %v1344
    %v1358 = vpack.c.b16 %v1347, %v1346
    %v1359 = vpack.c.b16 %v1349, %v1348
    %v1360 = vpack.c.b16 %v1351, %v1350
    %v1361 = vpack.c.b16 %v1353, %v1352
    %1370 = vmatprep.subr.bf16.mxu0 0
    %1371 = vmatpush1.bf16.msra.mxu0 %v1354
    %1372 = vmatprep.subr.bf16.mxu0 0
    %1373 = vmatpush1.bf16.msra.mxu0 %v1355
    %1374 = vmatprep.subr.bf16.mxu0 0
    %1375 = vmatpush1.bf16.msra.mxu0 %v1356
    %1376 = vmatprep.subr.bf16.mxu0 0
    %1377 = vmatpush1.bf16.msra.mxu0 %v1357
    %1378 = vmatprep.subr.bf16.mxu0 0
    %1379 = vmatpush1.bf16.msra.mxu0 %v1358
    %1380 = vmatprep.subr.bf16.mxu0 0
    %1381 = vmatpush1.bf16.msra.mxu0 %v1359
    %1382 = vmatprep.subr.bf16.mxu0 0
    %1383 = vmatpush1.bf16.msra.mxu0 %v1360
    %1384 = vmatprep.subr.bf16.mxu0 0
    %1385 = vmatpush1.bf16.msra.mxu0 %v1361
    %1386 = vmatprep.subr.bf16.mxu0 0
    %1387 = vmatpush1.bf16.msra.mxu0 0
    %1388 = vmatprep.subr.bf16.mxu0 0
    %1389 = vmatpush1.bf16.msra.mxu0 0
    %1390 = vmatprep.subr.bf16.mxu0 0
    %1391 = vmatpush1.bf16.msra.mxu0 0
    %1392 = vmatprep.subr.bf16.mxu0 0
    %1393 = vmatpush1.bf16.msra.mxu0 0
    %1394 = vmatprep.subr.bf16.mxu0 0
    %1395 = vmatpush1.bf16.msra.mxu0 0
    %1396 = vmatprep.subr.bf16.mxu0 0
    %1397 = vmatpush1.bf16.msra.mxu0 0
    %1398 = vmatprep.subr.bf16.mxu0 0
    %1399 = vmatpush1.bf16.msra.mxu0 0
    %1400 = vmatprep.subr.bf16.mxu0 0
    %1401 = vmatpush1.bf16.msra.mxu0 0
    %1402 = vmatprep.mubr.bf16.mxu0 0
    %1403 = vmatmul.mubr.bf16.gmra.mrb[0].mxu0 %v1320
    %v1404 = vpop.f32.mrb[0].mxu0
    %v1405 = vadd.f32 %v1265, %v1404
    %v1406 = vpop.f32.mrb[0].mxu0
    %v1407 = vpop.f32.mrb[0].mxu0
    %v1408 = vadd.f32 %v1265, %v1407
    %v1409 = vpop.f32.mrb[0].mxu0
    %1410 = vdwg.mxu0
    %v1411 = vxor.u32 %v1405, 2147483648
    %v1412 = vxor.u32 %v1408, 2147483648
    %v1413 = vmul.f32 %v1411, 1.442695
    %v1414 = vpow.pop %v1413
    %v1415 = vmul.f32 %v1412, 1.442695
    %v1416 = vpow.pop %v1415
    %v1417 = vadd.f32 %v1414, 1.0
    %v1418 = vadd.f32 %v1416, 1.0
    %v1419 = vrcp.pop %v1417
    %v1420 = vmul.f32 1.0, %v1419
    %v1421 = vrcp.pop %v1418
    %v1422 = vmul.f32 1.0, %v1421
    %1423 = vst [vmem:[#allocation2] sm:$0xff] %v1420
    %1424 = vst [vmem:[#allocation2 + $0x8] sm:$0xff] %v1422
    // Predicated region
    $region18: #{forward.1} parent=1 // pred_check
      _
    $region19: #{forward.1} parent=1 // pred_check_branch
      %1426 = sbr.rel (0) target = $region21
    $region20: #{forward.1} parent=1 // pred_region
      %s1428 = ssub.s32 256, 256
      %1429 = vsyncadd [#allocation3], %s1428
      %s1430 = sshll.u32 [#allocation2], 4
      %s1431 = int_to_ptr.vmem [resolvable:$true] %s1430
      %1436 = dma.vmem_to_hbm [thread:$0]  %s1431, 256, %s4, [#allocation3], 128, 128, 8
    $region21: #{forward.1} parent=1 // pred_fallthru
      _
    // Predicated region
    $region22: #{forward.1} parent=1 // pred_check
      _
    $region23: #{forward.1} parent=1 // pred_check_branch
      %1438 = sbr.rel (0) target = $region25
    $region24: #{forward.1} parent=1 // pred_region
      %1439 = dma.done [#allocation3], 256
    $region25: #{forward.1} parent=1 // pred_fallthru
      _
    %1440 = vsyncpa [#allocation3], 1

</llo_original>
